<compile_context>
chip_gen: v6e
topology: v6e:2x2x1
jax: 0.10.0
libtpu: 0.0.40
codegen_flags: <defaults>
</compile_context>

<pallas_src>
import jax
import jax.numpy as jnp
from jax.experimental import pallas as pl
from jax.experimental.pallas import tpu as pltpu


def _se_gate_mul_kernel(wb_ref, s_ref, x_ref, o_ref):
    # wb_ref: (C_out, C_in+1) f32  -- fused [W | b], resident across the grid
    # s_ref : (C_in+1, 1)     f32  -- per-batch squeeze vector, last entry = 1
    # x_ref : (Tc, HW)     native  -- feature-map tile
    # o_ref : (Tc, HW)     native  -- output tile
    tc = x_ref.shape[0]
    c0 = pl.multiple_of(pl.program_id(1) * tc, 8)        # 8-aligned row offset
    logits = jnp.dot(wb_ref[pl.ds(c0, tc), :], s_ref[...],
                     preferred_element_type=jnp.float32)  # (Tc, 1) f32, MXU
    gate = pl.reciprocal(1.0 + jnp.exp(-logits), approx=False)  # EUP exp+recip
    # Multiply in f32 (jnp promotion), cast only on the store.
    o_ref[...] = (x_ref[...] * gate).astype(o_ref.dtype)


def _pick_channel_tile(c_out, hw, itemsize):
    """Largest divisor of c_out that (a) is a multiple of the dtype's native
    sublane tile, (b) keeps double-buffered in+out blocks a few MiB, and
    (c) leaves >= 2 grid steps so both v7x TensorCores get a tile."""
    sub = max(8, 32 // itemsize)              # f32: 8, bf16: 16, int8/fp8: 32
    if c_out % sub != 0:
        return c_out                          # full-extent block (divisibility exception)
    cands = [d for d in range(sub, c_out + 1, sub) if c_out % d == 0]
    budget = 8 << 20                          # 2 bufs x (in + out) bytes per block
    fits = [d for d in cands if 4 * d * hw * itemsize <= budget] or [min(cands)]
    two_step = [d for d in fits if c_out // d >= 2]
    return max(two_step) if two_step else max(fits)


def se_conv_sigmoid_mul(x361, x358, weight, bias):
    """x361: (N, C_in, 1, 1), x358: (N, C_out, H, W),
       weight: (C_out, C_in, 1, 1), bias: (C_out,)
       returns sigmoid(conv1x1(x361) + bias) * x358, shape (N, C_out, H, W)."""
    N, c_in = x361.shape[0], x361.shape[1]
    _, c_out, H, W = x358.shape
    hw = H * W

    # Small parameter / squeeze tensors: fold bias into the matvec so the
    # resident weight is a single (C_out, C_in+1) f32 block (no lane-padded
    # (C_out, 1) bias buffer, no second resident input).
    wb = jnp.concatenate(
        [weight.reshape(c_out, c_in).astype(jnp.float32),
         bias.reshape(c_out, 1).astype(jnp.float32)], axis=1)          # (C_out, C_in+1)
    s_aug = jnp.concatenate(
        [x361.reshape(N, c_in).astype(jnp.float32),
         jnp.ones((N, 1), jnp.float32)], axis=1).reshape(N, c_in + 1, 1)

    # Big feature map: NO upcast -- stream in native dtype, contiguous view.
    x3d = x358.reshape(N, c_out, hw)

    itemsize = jnp.dtype(x358.dtype).itemsize
    tc = _pick_channel_tile(c_out, hw, itemsize)
    n_ctiles = c_out // tc

    out = pl.pallas_call(
        _se_gate_mul_kernel,
        out_shape=jax.ShapeDtypeStruct((N, c_out, hw), x358.dtype),
        grid=(N, n_ctiles),
        in_specs=[
            # Resident fused weight|bias: constant block index => DMA'd once.
            pl.BlockSpec((c_out, c_in + 1), lambda n, c: (0, 0)),
            # Per-batch squeeze vector (tiny).
            pl.BlockSpec((None, c_in + 1, 1), lambda n, c: (n, 0, 0)),
            # Feature-map tile: full spatial extent on lanes, tc channels.
            pl.BlockSpec((None, tc, hw), lambda n, c: (n, c, 0)),
        ],
        out_specs=pl.BlockSpec((None, tc, hw), lambda n, c: (n, c, 0)),
        compiler_params=pltpu.CompilerParams(
            dimension_semantics=("parallel", "parallel")),
    )(wb, s_aug, x3d)

    return out.reshape(N, c_out, H, W)


def _reference(x361, x358, weight, bias):
    N, c_in = x361.shape[0], x361.shape[1]
    c_out = weight.shape[0]
    s = x361.reshape(N, c_in).astype(jnp.float32)
    w = weight.reshape(c_out, c_in).astype(jnp.float32)
    conv = s @ w.T + bias.astype(jnp.float32)[None, :]     # (N, C_out)
    gate = jax.nn.sigmoid(conv)[:, :, None, None]          # (N, C_out, 1, 1)
    return gate * x358.astype(jnp.float32)


if __name__ == "__main__":
    # Real module shapes (already small): 44 -> 1056 SE gate over a 14x14 map.
    N, C_IN, C_OUT, H, W = 1, 44, 1056, 14, 14

    key = jax.random.PRNGKey(0)
    k1, k2, k3, k4 = jax.random.split(key, 4)

    x361 = jax.random.normal(k1, (N, C_IN, 1, 1), dtype=jnp.float32)
    x358 = jax.random.normal(k2, (N, C_OUT, H, W), dtype=jnp.float32)

    weight = jax.random.normal(k3, (C_OUT, C_IN, 1, 1), dtype=jnp.float32) / jnp.sqrt(
        float(C_IN))
    bias = jax.random.normal(k4, (C_OUT,), dtype=jnp.float32) * 0.01

    # f32 path (matches the PyTorch module's default dtype).
    out = jax.block_until_ready(se_conv_sigmoid_mul(x361, x358, weight, bias))
    ref = _reference(x361, x358, weight, bias)
    assert out.shape == (N, C_OUT, H, W)
    assert out.dtype == x358.dtype
    assert jnp.allclose(out, ref, atol=1e-5, rtol=1e-5), "f32 mismatch vs reference"

    # bf16 path: feature map streamed in native bf16, multiply done in f32,
    # cast only on store (tc = 528 is a multiple of the bf16 sublane tile 16).
    x358_bf16 = x358.astype(jnp.bfloat16)
    out_bf16 = jax.block_until_ready(
        se_conv_sigmoid_mul(x361, x358_bf16, weight, bias))
    ref_bf16 = _reference(x361, x358_bf16, weight, bias)
    assert out_bf16.dtype == jnp.bfloat16
    assert jnp.allclose(out_bf16.astype(jnp.float32), ref_bf16,
                        atol=5e-2, rtol=5e-2), "bf16 mismatch vs reference"

    print("KERNEL_OK")
</pallas_src>

<mosaic_0001>
module attributes {stable_mosaic.version = 11 : i64} {
  func.func @_se_gate_mul_kernel(%arg0: i32, %arg1: i32, %arg2: memref<1056x45xf32, #tpu.memory_space<vmem>>, %arg3: memref<1x45x1xf32, #tpu.memory_space<vmem>>, %arg4: memref<1x528x196xf32, #tpu.memory_space<vmem>>, %arg5: memref<1x528x196xf32, #tpu.memory_space<vmem>>) attributes {dimension_semantics = [#tpu.dimension_semantics<parallel>, #tpu.dimension_semantics<parallel>], iteration_bounds = array<i64: 1, 2>, scalar_prefetch = 0 : i64, scratch_operands = 0 : i64, tpu.core_type = #tpu.core_type<tc>, window_params = [{pipeline_mode = #tpu.pipeline_mode<synchronous>, transform_indices = @transform_0, window_bounds = array<i64: 1056, 45>}, {transform_indices = @transform_1, window_bounds = array<i64: 1, 45, 1>}, {transform_indices = @transform_2, window_bounds = array<i64: 1, 528, 196>}, {transform_indices = @transform_3, window_bounds = array<i64: 1, 528, 196>}]} {
    %c528_i32 = arith.constant 528 : i32
    %0 = arith.muli %arg1, %c528_i32 : i32
    %1 = tpu.assume_multiple %0, 8 : i32
    %2 = arith.index_cast %1 : i32 to index
    %c0 = arith.constant 0 : index
    %3 = vector.load %arg2[%2, %c0] : memref<1056x45xf32, #tpu.memory_space<vmem>>, vector<528x45xf32>
    %c0_0 = arith.constant 0 : index
    %c0_1 = arith.constant 0 : index
    %c0_2 = arith.constant 0 : index
    %4 = vector.load %arg3[%c0_0, %c0_1, %c0_2] : memref<1x45x1xf32, #tpu.memory_space<vmem>>, vector<1x45x1xf32>
    %5 = vector.shape_cast %4 : vector<1x45x1xf32> to vector<45x1xf32>
    %cst = arith.constant dense<0.000000e+00> : vector<528x1xf32>
    %6 = tpu.matmul %3, %5, %cst {dimension_numbers = #tpu.dot_dimension_numbers<[1], [0], [0], [1], [0, 0, 1, 1], [], []>} : vector<528x45xf32>, vector<45x1xf32>, vector<528x1xf32> -> vector<528x1xf32>
    %cst_3 = arith.constant 0.000000e+00 : f32
    %7 = vector.broadcast %cst_3 : f32 to vector<528x1xf32>
    %8 = arith.subf %7, %6 : vector<528x1xf32>
    %9 = math.exp %8 : vector<528x1xf32>
    %cst_4 = arith.constant 1.000000e+00 : f32
    %10 = vector.broadcast %cst_4 : f32 to vector<528x1xf32>
    %11 = arith.addf %10, %9 : vector<528x1xf32>
    %12 = tpu.reciprocal %11 : vector<528x1xf32> -> vector<528x1xf32>
    %c0_5 = arith.constant 0 : index
    %c0_6 = arith.constant 0 : index
    %c0_7 = arith.constant 0 : index
    %13 = vector.load %arg4[%c0_5, %c0_6, %c0_7] : memref<1x528x196xf32, #tpu.memory_space<vmem>>, vector<1x528x196xf32>
    %14 = vector.shape_cast %13 : vector<1x528x196xf32> to vector<528x196xf32>
    %15 = vector.broadcast %12 : vector<528x1xf32> to vector<528x196xf32>
    %16 = arith.mulf %14, %15 : vector<528x196xf32>
    %c0_8 = arith.constant 0 : index
    %c0_9 = arith.constant 0 : index
    %c0_10 = arith.constant 0 : index
    %17 = vector.load %arg5[%c0_8, %c0_9, %c0_10] : memref<1x528x196xf32, #tpu.memory_space<vmem>>, vector<1x528x196xf32>
    %18 = vector.shape_cast %17 : vector<1x528x196xf32> to vector<528x196xf32>
    %19 = vector.shape_cast %16 : vector<528x196xf32> to vector<1x528x196xf32>
    tpu.vector_store %arg5[%c0_8, %c0_9, %c0_10], %19 {strides = array<i32>} : memref<1x528x196xf32, #tpu.memory_space<vmem>>, vector<1x528x196xf32>,
    return
  }
  func.func @transform_0(%arg0: i32, %arg1: i32) -> (i32, i32) {
    %c0_i32 = arith.constant 0 : i32
    %c0_i32_0 = arith.constant 0 : i32
    %c0_i32_1 = arith.constant 0 : i32
    return %c0_i32, %c0_i32_0 : i32, i32
  }
  func.func @transform_1(%arg0: i32, %arg1: i32) -> (i32, i32, i32) {
    %c0_i32 = arith.constant 0 : i32
    %c0_i32_0 = arith.constant 0 : i32
    %c0_i32_1 = arith.constant 0 : i32
    return %arg0, %c0_i32, %c0_i32_0 : i32, i32, i32
  }
  func.func @transform_2(%arg0: i32, %arg1: i32) -> (i32, i32, i32) {
    %c0_i32 = arith.constant 0 : i32
    %c0_i32_0 = arith.constant 0 : i32
    return %arg0, %arg1, %c0_i32 : i32, i32, i32
  }
  func.func @transform_3(%arg0: i32, %arg1: i32) -> (i32, i32, i32) {
    %c0_i32 = arith.constant 0 : i32
    %c0_i32_0 = arith.constant 0 : i32
    return %arg0, %arg1, %c0_i32 : i32, i32, i32
  }
}

</mosaic_0001>

<llo_original>
// kernel: tpu_custom_call.1
$region0: #{tpu_custom_call.1}
  #allocation0 [shape = 'u32[]', space=smem, size = 0x4, offset = 0x4, fixed_abs, tag = 'smem constant byte address 0x4 - core index']
  #allocation1 [shape = 'u32[144,128]{1,0:T(1,128)}', space=vmem, size = 0x12000, scoped, tag = 'internal scratch']
  %s0 = inlined_call_operand.vmem [shape: f32[1056,45], index: 0, kind: input, shape index: {}]
  %s1 = inlined_call_operand.vmem [shape: f32[1,45,1], index: 1, kind: input, shape index: {}]
  %s2 = inlined_call_operand.vmem [shape: f32[1,1056,196], index: 2, kind: input, shape index: {}]
  %s3 = inlined_call_operand.vmem [shape: f32[1,1056,196], index: 3, kind: output, shape index: {}]
  %s4 = sld [smem:[#allocation0]]
  $region45: #{tpu_custom_call.1} parent=0
    _
  %s6 = ssub.s32 1, %s4
  %s7 = scalar_select 0, %s6, %s4
  loop: start=0, step=1, limit=4
  $region2: #{tpu_custom_call.1} parent=0 // loop_pre_header
    _
  $region3: #{tpu_custom_call.1} parent=0 // loop_header
    %s9 = sphi 0, %s13
    %p10 = scmp.ge.s32.totalorder %s9, 4
    %s16 = sphi 0, %s28
    %s17 = sphi 0, %s24
    %s18 = sphi 0, %s16
    %s19 = sphi 0, %s17
    %s20 = sphi 0, %s18
    %s21 = sphi 0, %s19
    %s29 = sphi 0, %s29
    %s31 = sphi 0, %s29
    %s32 = sphi 0, %s31
    %s46 = sphi 0, %s32
    %s52 = sphi 0, %s54
    %s55 = sphi 0, %s52
    %s56 = sphi 0, %s55
    %s72 = sphi 0, %s56
    %s80 = sphi 0, %s82
    %s83 = sphi 0, %s80
    %s84 = sphi 0, %s83
    %s100 = sphi 0, %s84
    %s108 = sphi 0, %s110
    %s111 = sphi 0, %s108
    %s112 = sphi 0, %s111
    %s128 = sphi 0, %s112
  $region4: #{tpu_custom_call.1} parent=0 // loop_header_branch
    %12 = sbr.rel (%p10) target = $region8
  $region5: #{tpu_custom_call.1} parent=0 // loop_body
    %s14 = ssub.s32 %s9, 1
    %s15 = ssub.s32 %s9, 2
    %s22 = sadd.s32 1, %s17
    %p23 = scmp.ge.s32.totalorder %s22, 2
    %s24 = scalar_select %p23, 0, %s22
    %s25 = sadd.s32 1, %s16
    %s26 = scalar_select %p23, %s25, %s16
    %p27 = scmp.ge.s32.totalorder %s26, 1
    %s28 = scalar_select %p27, 0, %s26
    %s30 = sadd.s32 %s29, 1
    %p33 = scmp.eq.s32.totalorder %s9, 1
    %p34 = scmp.ne.s32.totalorder %s29, %s31
    %p35 = scmp.eq.s32.totalorder %s9, 0
    %p36 = por %p34, %p35
    %p37 = scmp.ne.s32.totalorder %s29, %s31
    %p38 = scmp.eq.s32.totalorder %s14, 1
    %p39 = por %p37, %p38
    %p40 = scmp.ne.s32.totalorder %s31, %s32
    %p41 = scmp.eq.s32.totalorder %s14, 0
    %p42 = por %p40, %p41
    %p43 = scmp.ne.s32.totalorder %s31, %s32
    %p44 = scmp.eq.s32.totalorder %s15, 1
    %p45 = por %p43, %p44
    %p47 = scmp.ne.s32.totalorder %s32, %s46
    %p48 = scmp.eq.s32.totalorder %s15, 0
    %p49 = por %p47, %p48
    %s50 = ssub.s32 %s16, %s28
    %p51 = scmp.eq.s32.totalorder %s50, 0
    %s53 = sadd.s32 %s52, 1
    %s54 = scalar_select %p51, %s52, %s53
    %p57 = pneg %p51
    %p58 = scmp.eq.s32.totalorder %s9, 1
    %p59 = por %p57, %p58
    %p60 = scmp.ne.s32.totalorder %s52, %s55
    %p61 = scmp.eq.s32.totalorder %s9, 0
    %p62 = por %p60, %p61
    %p63 = scmp.ne.s32.totalorder %s52, %s55
    %p64 = scmp.eq.s32.totalorder %s14, 1
    %p65 = por %p63, %p64
    %p66 = scmp.ne.s32.totalorder %s55, %s56
    %p67 = scmp.eq.s32.totalorder %s14, 0
    %p68 = por %p66, %p67
    %p69 = scmp.ne.s32.totalorder %s55, %s56
    %p70 = scmp.eq.s32.totalorder %s15, 1
    %p71 = por %p69, %p70
    %p73 = scmp.ne.s32.totalorder %s56, %s72
    %p74 = scmp.eq.s32.totalorder %s15, 0
    %p75 = por %p73, %p74
    %s76 = ssub.s32 %s16, %s28
    %s77 = ssub.s32 %s17, %s24
    %s78 = sor.u32 %s76, %s77
    %p79 = scmp.eq.s32.totalorder %s78, 0
    %s81 = sadd.s32 %s80, 1
    %s82 = scalar_select %p79, %s80, %s81
    %p85 = pneg %p79
    %p86 = scmp.eq.s32.totalorder %s9, 1
    %p87 = por %p85, %p86
    %p88 = scmp.ne.s32.totalorder %s80, %s83
    %p89 = scmp.eq.s32.totalorder %s9, 0
    %p90 = por %p88, %p89
    %p91 = scmp.ne.s32.totalorder %s80, %s83
    %p92 = scmp.eq.s32.totalorder %s14, 1
    %p93 = por %p91, %p92
    %p94 = scmp.ne.s32.totalorder %s83, %s84
    %p95 = scmp.eq.s32.totalorder %s14, 0
    %p96 = por %p94, %p95
    %p97 = scmp.ne.s32.totalorder %s83, %s84
    %p98 = scmp.eq.s32.totalorder %s15, 1
    %p99 = por %p97, %p98
    %p101 = scmp.ne.s32.totalorder %s84, %s100
    %p102 = scmp.eq.s32.totalorder %s15, 0
    %p103 = por %p101, %p102
    %s104 = ssub.s32 %s16, %s28
    %s105 = ssub.s32 %s17, %s24
    %s106 = sor.u32 %s104, %s105
    %p107 = scmp.eq.s32.totalorder %s106, 0
    %s109 = sadd.s32 %s108, 1
    %s110 = scalar_select %p107, %s108, %s109
    %p113 = pneg %p107
    %p114 = scmp.eq.s32.totalorder %s9, 1
    %p115 = por %p113, %p114
    %p116 = scmp.ne.s32.totalorder %s108, %s111
    %p117 = scmp.eq.s32.totalorder %s9, 0
    %p118 = por %p116, %p117
    %p119 = scmp.ne.s32.totalorder %s108, %s111
    %p120 = scmp.eq.s32.totalorder %s14, 1
    %p121 = por %p119, %p120
    %p122 = scmp.ne.s32.totalorder %s111, %s112
    %p123 = scmp.eq.s32.totalorder %s14, 0
    %p124 = por %p122, %p123
    %p125 = scmp.ne.s32.totalorder %s111, %s112
    %p126 = scmp.eq.s32.totalorder %s15, 1
    %p127 = por %p125, %p126
    %p129 = scmp.ne.s32.totalorder %s112, %s128
    %p130 = scmp.eq.s32.totalorder %s15, 0
    %p131 = por %p129, %p130
    %p132 = scmp.le.s32.totalorder 1, %s9
    %p133 = scmp.lt.s32.totalorder %s9, 3
    %p134 = pnand %p132, %p133
    %p135 = pneg %p134
    // Predicated region
    $region9: #{tpu_custom_call.1} parent=5 // pred_check
      _
    $region10: #{tpu_custom_call.1} parent=5 // pred_check_branch
      %137 = sbr.rel (%p134) target = $region12
    $region11: #{tpu_custom_call.1} parent=5 // pred_region
      %s138 = ssub.s32 %s9, 1
      // Predicated region
      $region13: #{tpu_custom_call.1} parent=11 // pred_check
        %p139 = pneg %p42
      $region14: #{tpu_custom_call.1} parent=11 // pred_check_branch
        %141 = sbr.rel (%p139) target = $region16
      $region15: #{tpu_custom_call.1} parent=11 // pred_region
        _
      $region16: #{tpu_custom_call.1} parent=11 // pred_fallthru
        _
      // Predicated region
      $region17: #{tpu_custom_call.1} parent=11 // pred_check
        %p142 = pneg %p68
      $region18: #{tpu_custom_call.1} parent=11 // pred_check_branch
        %144 = sbr.rel (%p142) target = $region20
      $region19: #{tpu_custom_call.1} parent=11 // pred_region
        %p145 = scmp.lt.s32.totalorder %s18, 0
        %s146 = scalar_select %p145, %s18, 0
        %s147 = smul.addr %s146, 6
        %s148 = smul.addr %s147, 8
        %s149 = scalar_lea.vmem %s1, %s148
      $region20: #{tpu_custom_call.1} parent=11 // pred_fallthru
        _
    $region12: #{tpu_custom_call.1} parent=5 // pred_fallthru
      _
    %p150 = scmp.lt.s32.totalorder %s9, 2
    // Predicated region
    $region21: #{tpu_custom_call.1} parent=5 // pred_check
      %p151 = pneg %p150
    $region22: #{tpu_custom_call.1} parent=5 // pred_check_branch
      %153 = sbr.rel (%p151) target = $region24
    $region23: #{tpu_custom_call.1} parent=5 // pred_region
      // Predicated region
      $region25: #{tpu_custom_call.1} parent=23 // pred_check
        %p154 = pneg %p90
      $region26: #{tpu_custom_call.1} parent=23 // pred_check_branch
        %156 = sbr.rel (%p154) target = $region28
      $region27: #{tpu_custom_call.1} parent=23 // pred_region
        %s157 = smul.u32 66, %s17
        %p158 = scmp.lt.s32.totalorder %s16, 0
        %s159 = scalar_select %p158, %s16, 0
        %p160 = scmp.lt.s32.totalorder %s157, 131
        %s161 = scalar_select %p160, %s157, 131
        %s162 = smul.addr %s161, 2
        %s163 = smul.addr %s159, 264
        %s164 = sadd.s32 %s162, %s163
        %s165 = smul.addr %s164, 8
        %s166 = scalar_lea.vmem %s2, %s165
        %s167 = smul.u32 66, %s17
      $region28: #{tpu_custom_call.1} parent=23 // pred_fallthru
        _
    $region24: #{tpu_custom_call.1} parent=5 // pred_fallthru
      _
    %p168 = scmp.le.s32.totalorder 1, %s9
    %p169 = scmp.lt.s32.totalorder %s9, 3
    %p170 = pnand %p168, %p169
    %p171 = pneg %p170
    // Predicated region
    $region29: #{tpu_custom_call.1} parent=5 // pred_check
      _
    $region30: #{tpu_custom_call.1} parent=5 // pred_check_branch
      %173 = sbr.rel (%p170) target = $region32
    $region31: #{tpu_custom_call.1} parent=5 // pred_region
      %s174 = ssub.s32 %s9, 1
      %p175 = pneg %p42
      %p176 = pneg %p39
      %p177 = scmp.lt.s32.totalorder %s18, 0
      %s178 = scalar_select %p177, %s18, 0
      %s179 = smul.addr %s178, 6
      %s180 = smul.addr %s179, 8
      %s181 = scalar_lea.vmem %s1, %s180
      %p182 = pneg %p68
      %p183 = pneg %p65
      %s184 = smul.u32 66, %s19
      %p185 = scmp.lt.s32.totalorder %s18, 0
      %s186 = scalar_select %p185, %s18, 0
      %p187 = scmp.lt.s32.totalorder %s184, 131
      %s188 = scalar_select %p187, %s184, 131
      %s189 = smul.addr %s188, 2
      %s190 = smul.addr %s186, 264
      %s191 = sadd.s32 %s189, %s190
      %s192 = smul.addr %s191, 8
      %s193 = scalar_lea.vmem %s2, %s192
      %p194 = pneg %p96
      %p195 = pneg %p93
      %p196 = pneg %p124
      %p197 = pneg %p121
      %s198 = smul.u32 66, %s19
      %p199 = scmp.lt.s32.totalorder %s18, 0
      %s200 = scalar_select %p199, %s18, 0
      %p201 = scmp.lt.s32.totalorder %s198, 131
      %s202 = scalar_select %p201, %s198, 131
      %s203 = smul.addr %s202, 2
      %s204 = smul.addr %s200, 264
      %s205 = sadd.s32 %s203, %s204
      %s206 = smul.addr %s205, 8
      %s207 = scalar_lea.vmem %s3, %s206
      %p208 = scmp.lt.s32.totalorder %s18, 0
      %s209 = scalar_select %p208, %s18, 0
      %s210 = smul.addr %s209, 6
      %s211 = smul.addr %s210, 8
      %s212 = scalar_lea.vmem %s1, %s211
      %s213 = smul.u32 66, %s19
      %p214 = scmp.lt.s32.totalorder %s18, 0
      %s215 = scalar_select %p214, %s18, 0
      %p216 = scmp.lt.s32.totalorder %s213, 131
      %s217 = scalar_select %p216, %s213, 131
      %s218 = smul.addr %s217, 2
      %s219 = smul.addr %s215, 264
      %s220 = sadd.s32 %s218, %s219
      %s221 = smul.addr %s220, 8
      %s222 = scalar_lea.vmem %s2, %s221
      %s223 = smul.u32 66, %s19
      %s224 = smul.u32 66, %s19
      %p225 = scmp.lt.s32.totalorder %s18, 0
      %s226 = scalar_select %p225, %s18, 0
      %p227 = scmp.lt.s32.totalorder %s224, 131
      %s228 = scalar_select %p227, %s224, 131
      %s229 = smul.addr %s228, 2
      %s230 = smul.addr %s226, 264
      %s231 = sadd.s32 %s229, %s230
      %s232 = smul.addr %s231, 8
      %s233 = scalar_lea.vmem %s3, %s232
      %s234 = smul.u32 66, %s19
      %s235 = smul.u32 %s19, 528
      %s236 = scalar_lea.vmem %s0, %s235
      %v237 = vld [vmem:[%s236] sm:$0xff]
      %v238 = vld [vmem:[%s236 + $0x8] sm:$0xff]
      %v239 = vld [vmem:[%s236 + $0x10] sm:$0xff]
      %v240 = vld [vmem:[%s236 + $0x18] sm:$0xff]
      %v241 = vld [vmem:[%s236 + $0x20] sm:$0xff]
      %v242 = vld [vmem:[%s236 + $0x28] sm:$0xff]
      %v243 = vld [vmem:[%s236 + $0x30] sm:$0xff]
      %v244 = vld [vmem:[%s236 + $0x38] sm:$0xff]
      %v245 = vld [vmem:[%s236 + $0x40] sm:$0xff]
      %v246 = vld [vmem:[%s236 + $0x48] sm:$0xff]
      %v247 = vld [vmem:[%s236 + $0x50] sm:$0xff]
      %v248 = vld [vmem:[%s236 + $0x58] sm:$0xff]
      %v249 = vld [vmem:[%s236 + $0x60] sm:$0xff]
      %v250 = vld [vmem:[%s236 + $0x68] sm:$0xff]
      %v251 = vld [vmem:[%s236 + $0x70] sm:$0xff]
      %v252 = vld [vmem:[%s236 + $0x78] sm:$0xff]
      %v253 = vld [vmem:[%s236 + $0x80] sm:$0xff]
      %v254 = vld [vmem:[%s236 + $0x88] sm:$0xff]
      %v255 = vld [vmem:[%s236 + $0x90] sm:$0xff]
      %v256 = vld [vmem:[%s236 + $0x98] sm:$0xff]
      %v257 = vld [vmem:[%s236 + $0xa0] sm:$0xff]
      %v258 = vld [vmem:[%s236 + $0xa8] sm:$0xff]
      %v259 = vld [vmem:[%s236 + $0xb0] sm:$0xff]
      %v260 = vld [vmem:[%s236 + $0xb8] sm:$0xff]
      %v261 = vld [vmem:[%s236 + $0xc0] sm:$0xff]
      %v262 = vld [vmem:[%s236 + $0xc8] sm:$0xff]
      %v263 = vld [vmem:[%s236 + $0xd0] sm:$0xff]
      %v264 = vld [vmem:[%s236 + $0xd8] sm:$0xff]
      %v265 = vld [vmem:[%s236 + $0xe0] sm:$0xff]
      %v266 = vld [vmem:[%s236 + $0xe8] sm:$0xff]
      %v267 = vld [vmem:[%s236 + $0xf0] sm:$0xff]
      %v268 = vld [vmem:[%s236 + $0xf8] sm:$0xff]
      %v269 = vld [vmem:[%s236 + $0x100] sm:$0xff]
      %v270 = vld [vmem:[%s236 + $0x108] sm:$0xff]
      %v271 = vld [vmem:[%s236 + $0x110] sm:$0xff]
      %v272 = vld [vmem:[%s236 + $0x118] sm:$0xff]
      %v273 = vld [vmem:[%s236 + $0x120] sm:$0xff]
      %v274 = vld [vmem:[%s236 + $0x128] sm:$0xff]
      %v275 = vld [vmem:[%s236 + $0x130] sm:$0xff]
      %v276 = vld [vmem:[%s236 + $0x138] sm:$0xff]
      %v277 = vld [vmem:[%s236 + $0x140] sm:$0xff]
      %v278 = vld [vmem:[%s236 + $0x148] sm:$0xff]
      %v279 = vld [vmem:[%s236 + $0x150] sm:$0xff]
      %v280 = vld [vmem:[%s236 + $0x158] sm:$0xff]
      %v281 = vld [vmem:[%s236 + $0x160] sm:$0xff]
      %v282 = vld [vmem:[%s236 + $0x168] sm:$0xff]
      %v283 = vld [vmem:[%s236 + $0x170] sm:$0xff]
      %v284 = vld [vmem:[%s236 + $0x178] sm:$0xff]
      %v285 = vld [vmem:[%s236 + $0x180] sm:$0xff]
      %v286 = vld [vmem:[%s236 + $0x188] sm:$0xff]
      %v287 = vld [vmem:[%s236 + $0x190] sm:$0xff]
      %v288 = vld [vmem:[%s236 + $0x198] sm:$0xff]
      %v289 = vld [vmem:[%s236 + $0x1a0] sm:$0xff]
      %v290 = vld [vmem:[%s236 + $0x1a8] sm:$0xff]
      %v291 = vld [vmem:[%s236 + $0x1b0] sm:$0xff]
      %v292 = vld [vmem:[%s236 + $0x1b8] sm:$0xff]
      %v293 = vld [vmem:[%s236 + $0x1c0] sm:$0xff]
      %v294 = vld [vmem:[%s236 + $0x1c8] sm:$0xff]
      %v295 = vld [vmem:[%s236 + $0x1d0] sm:$0xff]
      %v296 = vld [vmem:[%s236 + $0x1d8] sm:$0xff]
      %v297 = vld [vmem:[%s236 + $0x1e0] sm:$0xff]
      %v298 = vld [vmem:[%s236 + $0x1e8] sm:$0xff]
      %v299 = vld [vmem:[%s236 + $0x1f0] sm:$0xff]
      %v300 = vld [vmem:[%s236 + $0x1f8] sm:$0xff]
      %v301 = vld [vmem:[%s236 + $0x200] sm:$0xff]
      %v302 = vld [vmem:[%s236 + $0x208] sm:$0xff]
      %v303 = vld [vmem:[%s212] sm:$0xff]
      %v304 = vld [vmem:[%s212 + $0x8] sm:$0xff]
      %v305 = vld [vmem:[%s212 + $0x10] sm:$0xff]
      %v306 = vld [vmem:[%s212 + $0x18] sm:$0xff]
      %v307 = vld [vmem:[%s212 + $0x20] sm:$0xff]
      %v308 = vld [vmem:[%s212 + $0x28] sm:$0x1f]
      %vm309 = vcmask 367616
      %v311 = vsel %vm309, %v237, 0
      %v314 = vsel %vm309, %v238, 0
      %v317 = vsel %vm309, %v239, 0
      %v320 = vsel %vm309, %v240, 0
      %v323 = vsel %vm309, %v241, 0
      %v326 = vsel %vm309, %v242, 0
      %v329 = vsel %vm309, %v243, 0
      %v332 = vsel %vm309, %v244, 0
      %v335 = vsel %vm309, %v245, 0
      %v338 = vsel %vm309, %v246, 0
      %v341 = vsel %vm309, %v247, 0
      %v344 = vsel %vm309, %v248, 0
      %v347 = vsel %vm309, %v249, 0
      %v350 = vsel %vm309, %v250, 0
      %v353 = vsel %vm309, %v251, 0
      %v356 = vsel %vm309, %v252, 0
      %v359 = vsel %vm309, %v253, 0
      %v362 = vsel %vm309, %v254, 0
      %v365 = vsel %vm309, %v255, 0
      %v368 = vsel %vm309, %v256, 0
      %v371 = vsel %vm309, %v257, 0
      %v374 = vsel %vm309, %v258, 0
      %v377 = vsel %vm309, %v259, 0
      %v380 = vsel %vm309, %v260, 0
      %v383 = vsel %vm309, %v261, 0
      %v386 = vsel %vm309, %v262, 0
      %v389 = vsel %vm309, %v263, 0
      %v392 = vsel %vm309, %v264, 0
      %v395 = vsel %vm309, %v265, 0
      %v398 = vsel %vm309, %v266, 0
      %v401 = vsel %vm309, %v267, 0
      %v404 = vsel %vm309, %v268, 0
      %v407 = vsel %vm309, %v269, 0
      %v410 = vsel %vm309, %v270, 0
      %v413 = vsel %vm309, %v271, 0
      %v416 = vsel %vm309, %v272, 0
      %v419 = vsel %vm309, %v273, 0
      %v422 = vsel %vm309, %v274, 0
      %v425 = vsel %vm309, %v275, 0
      %v428 = vsel %vm309, %v276, 0
      %v431 = vsel %vm309, %v277, 0
      %v434 = vsel %vm309, %v278, 0
      %v437 = vsel %vm309, %v279, 0
      %v440 = vsel %vm309, %v280, 0
      %v443 = vsel %vm309, %v281, 0
      %v446 = vsel %vm309, %v282, 0
      %v449 = vsel %vm309, %v283, 0
      %v452 = vsel %vm309, %v284, 0
      %v455 = vsel %vm309, %v285, 0
      %v458 = vsel %vm309, %v286, 0
      %v461 = vsel %vm309, %v287, 0
      %v464 = vsel %vm309, %v288, 0
      %v467 = vsel %vm309, %v289, 0
      %v470 = vsel %vm309, %v290, 0
      %v473 = vsel %vm309, %v291, 0
      %v476 = vsel %vm309, %v292, 0
      %v479 = vsel %vm309, %v293, 0
      %v482 = vsel %vm309, %v294, 0
      %v485 = vsel %vm309, %v295, 0
      %v488 = vsel %vm309, %v296, 0
      %v491 = vsel %vm309, %v297, 0
      %v494 = vsel %vm309, %v298, 0
      %v497 = vsel %vm309, %v299, 0
      %v500 = vsel %vm309, %v300, 0
      %v503 = vsel %vm309, %v301, 0
      %v506 = vsel %vm309, %v302, 0
      %vm508 = vcmask 1044480
      %v510 = vsel %vm508, %v308, 0
      %512 = vmatprep.subr.mxu0 0.0
      %513 = vmatpush1.msra.mxu0 0.0
      %514 = vmatprep.subr.mxu0 0.0
      %515 = vmatpush1.msra.mxu0 0.0
      %516 = vmatprep.subr.mxu0 0.0
      %517 = vmatpush1.msra.mxu0 0.0
      %518 = vmatprep.subr.mxu0 0.0
      %519 = vmatpush1.msra.mxu0 0.0
      %520 = vmatprep.subr.mxu0 0.0
      %521 = vmatpush1.msra.mxu0 0.0
      %522 = vmatprep.subr.mxu0 0.0
      %523 = vmatpush1.msra.mxu0 0.0
      %524 = vmatprep.subr.mxu0 0.0
      %525 = vmatpush1.msra.mxu0 0.0
      %526 = vmatprep.subr.mxu0 0.0
      %527 = vmatpush1.msra.mxu0 0.0
      %528 = vmatprep.subr.mxu0 0.0
      %529 = vmatpush1.msra.mxu0 0.0
      %530 = vmatprep.subr.mxu0 0.0
      %531 = vmatpush1.msra.mxu0 0.0
      %532 = vmatprep.subr.mxu0 0.0
      %533 = vmatpush1.msra.mxu0 %v510
      %534 = vmatprep.subr.mxu0 0.0
      %535 = vmatpush1.msra.mxu0 %v307
      %536 = vmatprep.subr.mxu0 0.0
      %537 = vmatpush1.msra.mxu0 %v306
      %538 = vmatprep.subr.mxu0 0.0
      %539 = vmatpush1.msra.mxu0 %v305
      %540 = vmatprep.subr.mxu0 0.0
      %541 = vmatpush1.msra.mxu0 %v304
      %542 = vmatprep.subr.mxu0 0.0
      %543 = vmatpush1.msra.mxu0 %v303
      %544 = vmatprep.subr.mxu0 0.0
      %545 = vmatpush2.msra.mxu0 0.0
      %546 = vmatprep.subr.mxu0 0.0
      %547 = vmatpush2.msra.mxu0 0.0
      %548 = vmatprep.subr.mxu0 0.0
      %549 = vmatpush2.msra.mxu0 0.0
      %550 = vmatprep.subr.mxu0 0.0
      %551 = vmatpush2.msra.mxu0 0.0
      %552 = vmatprep.subr.mxu0 0.0
      %553 = vmatpush2.msra.mxu0 0.0
      %554 = vmatprep.subr.mxu0 0.0
      %555 = vmatpush2.msra.mxu0 0.0
      %556 = vmatprep.subr.mxu0 0.0
      %557 = vmatpush2.msra.mxu0 0.0
      %558 = vmatprep.subr.mxu0 0.0
      %559 = vmatpush2.msra.mxu0 0.0
      %560 = vmatprep.subr.mxu0 0.0
      %561 = vmatpush2.msra.mxu0 0.0
      %562 = vmatprep.subr.mxu0 0.0
      %563 = vmatpush2.msra.mxu0 0.0
      %564 = vmatprep.subr.mxu0 0.0
      %565 = vmatpush2.msra.mxu0 0.0
      %566 = vmatprep.subr.mxu0 0.0
      %567 = vmatpush2.msra.mxu0 0.0
      %568 = vmatprep.subr.mxu0 0.0
      %569 = vmatpush2.msra.mxu0 0.0
      %570 = vmatprep.subr.mxu0 0.0
      %571 = vmatpush2.msra.mxu0 0.0
      %572 = vmatprep.subr.mxu0 0.0
      %573 = vmatpush2.msra.mxu0 0.0
      %574 = vmatprep.subr.mxu0 0.0
      %575 = vmatpush2.msra.mxu0 0.0
      %576 = vmatprep.mubr.f32.mxu0 0.0
      %577 = vmatmul.mubr.f32.gmra.mxu0 %v311
      %v578 = vpop.f32.mrf.mxu0
      %v579 = vadd.f32 0.0, %v578
      %v580 = vpop.f32.mrf.mxu0
      %581 = vmatprep.mubr.f32.mxu0 0.0
      %582 = vmatmul.mubr.f32.gmra.mxu0 %v314
      %v583 = vpop.f32.mrf.mxu0
      %v584 = vadd.f32 0.0, %v583
      %v585 = vpop.f32.mrf.mxu0
      %586 = vmatprep.mubr.f32.mxu0 0.0
      %587 = vmatmul.mubr.f32.gmra.mxu0 %v317
      %v588 = vpop.f32.mrf.mxu0
      %v589 = vadd.f32 0.0, %v588
      %v590 = vpop.f32.mrf.mxu0
      %591 = vmatprep.mubr.f32.mxu0 0.0
      %592 = vmatmul.mubr.f32.gmra.mxu0 %v320
      %v593 = vpop.f32.mrf.mxu0
      %v594 = vadd.f32 0.0, %v593
      %v595 = vpop.f32.mrf.mxu0
      %596 = vmatprep.mubr.f32.mxu0 0.0
      %597 = vmatmul.mubr.f32.gmra.mxu0 %v323
      %v598 = vpop.f32.mrf.mxu0
      %v599 = vadd.f32 0.0, %v598
      %v600 = vpop.f32.mrf.mxu0
      %601 = vmatprep.mubr.f32.mxu0 0.0
      %602 = vmatmul.mubr.f32.gmra.mxu0 %v326
      %v603 = vpop.f32.mrf.mxu0
      %v604 = vadd.f32 0.0, %v603
      %v605 = vpop.f32.mrf.mxu0
      %606 = vmatprep.mubr.f32.mxu0 0.0
      %607 = vmatmul.mubr.f32.gmra.mxu0 %v329
      %v608 = vpop.f32.mrf.mxu0
      %v609 = vadd.f32 0.0, %v608
      %v610 = vpop.f32.mrf.mxu0
      %611 = vmatprep.mubr.f32.mxu0 0.0
      %612 = vmatmul.mubr.f32.gmra.mxu0 %v332
      %v613 = vpop.f32.mrf.mxu0
      %v614 = vadd.f32 0.0, %v613
      %v615 = vpop.f32.mrf.mxu0
      %616 = vmatprep.mubr.f32.mxu0 0.0
      %617 = vmatmul.mubr.f32.gmra.mxu0 %v335
      %v618 = vpop.f32.mrf.mxu0
      %v619 = vadd.f32 0.0, %v618
      %v620 = vpop.f32.mrf.mxu0
      %621 = vmatprep.mubr.f32.mxu0 0.0
      %622 = vmatmul.mubr.f32.gmra.mxu0 %v338
      %v623 = vpop.f32.mrf.mxu0
      %v624 = vadd.f32 0.0, %v623
      %v625 = vpop.f32.mrf.mxu0
      %626 = vmatprep.mubr.f32.mxu0 0.0
      %627 = vmatmul.mubr.f32.gmra.mxu0 %v341
      %v628 = vpop.f32.mrf.mxu0
      %v629 = vadd.f32 0.0, %v628
      %v630 = vpop.f32.mrf.mxu0
      %631 = vmatprep.mubr.f32.mxu0 0.0
      %632 = vmatmul.mubr.f32.gmra.mxu0 %v344
      %v633 = vpop.f32.mrf.mxu0
      %v634 = vadd.f32 0.0, %v633
      %v635 = vpop.f32.mrf.mxu0
      %636 = vmatprep.mubr.f32.mxu0 0.0
      %637 = vmatmul.mubr.f32.gmra.mxu0 %v347
      %v638 = vpop.f32.mrf.mxu0
      %v639 = vadd.f32 0.0, %v638
      %v640 = vpop.f32.mrf.mxu0
      %641 = vmatprep.mubr.f32.mxu0 0.0
      %642 = vmatmul.mubr.f32.gmra.mxu0 %v350
      %v643 = vpop.f32.mrf.mxu0
      %v644 = vadd.f32 0.0, %v643
      %v645 = vpop.f32.mrf.mxu0
      %646 = vmatprep.mubr.f32.mxu0 0.0
      %647 = vmatmul.mubr.f32.gmra.mxu0 %v353
      %v648 = vpop.f32.mrf.mxu0
      %v649 = vadd.f32 0.0, %v648
      %v650 = vpop.f32.mrf.mxu0
      %651 = vmatprep.mubr.f32.mxu0 0.0
      %652 = vmatmul.mubr.f32.gmra.mxu0 %v356
      %v653 = vpop.f32.mrf.mxu0
      %v654 = vadd.f32 0.0, %v653
      %v655 = vpop.f32.mrf.mxu0
      %656 = vmatprep.mubr.f32.mxu0 0.0
      %657 = vmatmul.mubr.f32.gmra.mxu0 %v359
      %v658 = vpop.f32.mrf.mxu0
      %v659 = vadd.f32 0.0, %v658
      %v660 = vpop.f32.mrf.mxu0
      %661 = vmatprep.mubr.f32.mxu0 0.0
      %662 = vmatmul.mubr.f32.gmra.mxu0 %v362
      %v663 = vpop.f32.mrf.mxu0
      %v664 = vadd.f32 0.0, %v663
      %v665 = vpop.f32.mrf.mxu0
      %666 = vmatprep.mubr.f32.mxu0 0.0
      %667 = vmatmul.mubr.f32.gmra.mxu0 %v365
      %v668 = vpop.f32.mrf.mxu0
      %v669 = vadd.f32 0.0, %v668
      %v670 = vpop.f32.mrf.mxu0
      %671 = vmatprep.mubr.f32.mxu0 0.0
      %672 = vmatmul.mubr.f32.gmra.mxu0 %v368
      %v673 = vpop.f32.mrf.mxu0
      %v674 = vadd.f32 0.0, %v673
      %v675 = vpop.f32.mrf.mxu0
      %676 = vmatprep.mubr.f32.mxu0 0.0
      %677 = vmatmul.mubr.f32.gmra.mxu0 %v371
      %v678 = vpop.f32.mrf.mxu0
      %v679 = vadd.f32 0.0, %v678
      %v680 = vpop.f32.mrf.mxu0
      %681 = vmatprep.mubr.f32.mxu0 0.0
      %682 = vmatmul.mubr.f32.gmra.mxu0 %v374
      %v683 = vpop.f32.mrf.mxu0
      %v684 = vadd.f32 0.0, %v683
      %v685 = vpop.f32.mrf.mxu0
      %686 = vmatprep.mubr.f32.mxu0 0.0
      %687 = vmatmul.mubr.f32.gmra.mxu0 %v377
      %v688 = vpop.f32.mrf.mxu0
      %v689 = vadd.f32 0.0, %v688
      %v690 = vpop.f32.mrf.mxu0
      %691 = vmatprep.mubr.f32.mxu0 0.0
      %692 = vmatmul.mubr.f32.gmra.mxu0 %v380
      %v693 = vpop.f32.mrf.mxu0
      %v694 = vadd.f32 0.0, %v693
      %v695 = vpop.f32.mrf.mxu0
      %696 = vmatprep.mubr.f32.mxu0 0.0
      %697 = vmatmul.mubr.f32.gmra.mxu0 %v383
      %v698 = vpop.f32.mrf.mxu0
      %v699 = vadd.f32 0.0, %v698
      %v700 = vpop.f32.mrf.mxu0
      %701 = vmatprep.mubr.f32.mxu0 0.0
      %702 = vmatmul.mubr.f32.gmra.mxu0 %v386
      %v703 = vpop.f32.mrf.mxu0
      %v704 = vadd.f32 0.0, %v703
      %v705 = vpop.f32.mrf.mxu0
      %706 = vmatprep.mubr.f32.mxu0 0.0
      %707 = vmatmul.mubr.f32.gmra.mxu0 %v389
      %v708 = vpop.f32.mrf.mxu0
      %v709 = vadd.f32 0.0, %v708
      %v710 = vpop.f32.mrf.mxu0
      %711 = vmatprep.mubr.f32.mxu0 0.0
      %712 = vmatmul.mubr.f32.gmra.mxu0 %v392
      %v713 = vpop.f32.mrf.mxu0
      %v714 = vadd.f32 0.0, %v713
      %v715 = vpop.f32.mrf.mxu0
      %716 = vmatprep.mubr.f32.mxu0 0.0
      %717 = vmatmul.mubr.f32.gmra.mxu0 %v395
      %v718 = vpop.f32.mrf.mxu0
      %v719 = vadd.f32 0.0, %v718
      %v720 = vpop.f32.mrf.mxu0
      %721 = vmatprep.mubr.f32.mxu0 0.0
      %722 = vmatmul.mubr.f32.gmra.mxu0 %v398
      %v723 = vpop.f32.mrf.mxu0
      %v724 = vadd.f32 0.0, %v723
      %v725 = vpop.f32.mrf.mxu0
      %726 = vmatprep.mubr.f32.mxu0 0.0
      %727 = vmatmul.mubr.f32.gmra.mxu0 %v401
      %v728 = vpop.f32.mrf.mxu0
      %v729 = vadd.f32 0.0, %v728
      %v730 = vpop.f32.mrf.mxu0
      %731 = vmatprep.mubr.f32.mxu0 0.0
      %732 = vmatmul.mubr.f32.gmra.mxu0 %v404
      %v733 = vpop.f32.mrf.mxu0
      %v734 = vadd.f32 0.0, %v733
      %v735 = vpop.f32.mrf.mxu0
      %736 = vmatprep.mubr.f32.mxu0 0.0
      %737 = vmatmul.mubr.f32.gmra.mxu0 %v407
      %v738 = vpop.f32.mrf.mxu0
      %v739 = vadd.f32 0.0, %v738
      %v740 = vpop.f32.mrf.mxu0
      %741 = vmatprep.mubr.f32.mxu0 0.0
      %742 = vmatmul.mubr.f32.gmra.mxu0 %v410
      %v743 = vpop.f32.mrf.mxu0
      %v744 = vadd.f32 0.0, %v743
      %v745 = vpop.f32.mrf.mxu0
      %746 = vmatprep.mubr.f32.mxu0 0.0
      %747 = vmatmul.mubr.f32.gmra.mxu0 %v413
      %v748 = vpop.f32.mrf.mxu0
      %v749 = vadd.f32 0.0, %v748
      %v750 = vpop.f32.mrf.mxu0
      %751 = vmatprep.mubr.f32.mxu0 0.0
      %752 = vmatmul.mubr.f32.gmra.mxu0 %v416
      %v753 = vpop.f32.mrf.mxu0
      %v754 = vadd.f32 0.0, %v753
      %v755 = vpop.f32.mrf.mxu0
      %756 = vmatprep.mubr.f32.mxu0 0.0
      %757 = vmatmul.mubr.f32.gmra.mxu0 %v419
      %v758 = vpop.f32.mrf.mxu0
      %v759 = vadd.f32 0.0, %v758
      %v760 = vpop.f32.mrf.mxu0
      %761 = vmatprep.mubr.f32.mxu0 0.0
      %762 = vmatmul.mubr.f32.gmra.mxu0 %v422
      %v763 = vpop.f32.mrf.mxu0
      %v764 = vadd.f32 0.0, %v763
      %v765 = vpop.f32.mrf.mxu0
      %766 = vmatprep.mubr.f32.mxu0 0.0
      %767 = vmatmul.mubr.f32.gmra.mxu0 %v425
      %v768 = vpop.f32.mrf.mxu0
      %v769 = vadd.f32 0.0, %v768
      %v770 = vpop.f32.mrf.mxu0
      %771 = vmatprep.mubr.f32.mxu0 0.0
      %772 = vmatmul.mubr.f32.gmra.mxu0 %v428
      %v773 = vpop.f32.mrf.mxu0
      %v774 = vadd.f32 0.0, %v773
      %v775 = vpop.f32.mrf.mxu0
      %776 = vmatprep.mubr.f32.mxu0 0.0
      %777 = vmatmul.mubr.f32.gmra.mxu0 %v431
      %v778 = vpop.f32.mrf.mxu0
      %v779 = vadd.f32 0.0, %v778
      %v780 = vpop.f32.mrf.mxu0
      %781 = vmatprep.mubr.f32.mxu0 0.0
      %782 = vmatmul.mubr.f32.gmra.mxu0 %v434
      %v783 = vpop.f32.mrf.mxu0
      %v784 = vadd.f32 0.0, %v783
      %v785 = vpop.f32.mrf.mxu0
      %786 = vmatprep.mubr.f32.mxu0 0.0
      %787 = vmatmul.mubr.f32.gmra.mxu0 %v437
      %v788 = vpop.f32.mrf.mxu0
      %v789 = vadd.f32 0.0, %v788
      %v790 = vpop.f32.mrf.mxu0
      %791 = vmatprep.mubr.f32.mxu0 0.0
      %792 = vmatmul.mubr.f32.gmra.mxu0 %v440
      %v793 = vpop.f32.mrf.mxu0
      %v794 = vadd.f32 0.0, %v793
      %v795 = vpop.f32.mrf.mxu0
      %796 = vmatprep.mubr.f32.mxu0 0.0
      %797 = vmatmul.mubr.f32.gmra.mxu0 %v443
      %v798 = vpop.f32.mrf.mxu0
      %v799 = vadd.f32 0.0, %v798
      %v800 = vpop.f32.mrf.mxu0
      %801 = vmatprep.mubr.f32.mxu0 0.0
      %802 = vmatmul.mubr.f32.gmra.mxu0 %v446
      %v803 = vpop.f32.mrf.mxu0
      %v804 = vadd.f32 0.0, %v803
      %v805 = vpop.f32.mrf.mxu0
      %806 = vmatprep.mubr.f32.mxu0 0.0
      %807 = vmatmul.mubr.f32.gmra.mxu0 %v449
      %v808 = vpop.f32.mrf.mxu0
      %v809 = vadd.f32 0.0, %v808
      %v810 = vpop.f32.mrf.mxu0
      %811 = vmatprep.mubr.f32.mxu0 0.0
      %812 = vmatmul.mubr.f32.gmra.mxu0 %v452
      %v813 = vpop.f32.mrf.mxu0
      %v814 = vadd.f32 0.0, %v813
      %v815 = vpop.f32.mrf.mxu0
      %816 = vmatprep.mubr.f32.mxu0 0.0
      %817 = vmatmul.mubr.f32.gmra.mxu0 %v455
      %v818 = vpop.f32.mrf.mxu0
      %v819 = vadd.f32 0.0, %v818
      %v820 = vpop.f32.mrf.mxu0
      %821 = vmatprep.mubr.f32.mxu0 0.0
      %822 = vmatmul.mubr.f32.gmra.mxu0 %v458
      %v823 = vpop.f32.mrf.mxu0
      %v824 = vadd.f32 0.0, %v823
      %v825 = vpop.f32.mrf.mxu0
      %826 = vmatprep.mubr.f32.mxu0 0.0
      %827 = vmatmul.mubr.f32.gmra.mxu0 %v461
      %v828 = vpop.f32.mrf.mxu0
      %v829 = vadd.f32 0.0, %v828
      %v830 = vpop.f32.mrf.mxu0
      %831 = vmatprep.mubr.f32.mxu0 0.0
      %832 = vmatmul.mubr.f32.gmra.mxu0 %v464
      %v833 = vpop.f32.mrf.mxu0
      %v834 = vadd.f32 0.0, %v833
      %v835 = vpop.f32.mrf.mxu0
      %836 = vmatprep.mubr.f32.mxu0 0.0
      %837 = vmatmul.mubr.f32.gmra.mxu0 %v467
      %v838 = vpop.f32.mrf.mxu0
      %v839 = vadd.f32 0.0, %v838
      %v840 = vpop.f32.mrf.mxu0
      %841 = vmatprep.mubr.f32.mxu0 0.0
      %842 = vmatmul.mubr.f32.gmra.mxu0 %v470
      %v843 = vpop.f32.mrf.mxu0
      %v844 = vadd.f32 0.0, %v843
      %v845 = vpop.f32.mrf.mxu0
      %846 = vmatprep.mubr.f32.mxu0 0.0
      %847 = vmatmul.mubr.f32.gmra.mxu0 %v473
      %v848 = vpop.f32.mrf.mxu0
      %v849 = vadd.f32 0.0, %v848
      %v850 = vpop.f32.mrf.mxu0
      %851 = vmatprep.mubr.f32.mxu0 0.0
      %852 = vmatmul.mubr.f32.gmra.mxu0 %v476
      %v853 = vpop.f32.mrf.mxu0
      %v854 = vadd.f32 0.0, %v853
      %v855 = vpop.f32.mrf.mxu0
      %856 = vmatprep.mubr.f32.mxu0 0.0
      %857 = vmatmul.mubr.f32.gmra.mxu0 %v479
      %v858 = vpop.f32.mrf.mxu0
      %v859 = vadd.f32 0.0, %v858
      %v860 = vpop.f32.mrf.mxu0
      %861 = vmatprep.mubr.f32.mxu0 0.0
      %862 = vmatmul.mubr.f32.gmra.mxu0 %v482
      %v863 = vpop.f32.mrf.mxu0
      %v864 = vadd.f32 0.0, %v863
      %v865 = vpop.f32.mrf.mxu0
      %866 = vmatprep.mubr.f32.mxu0 0.0
      %867 = vmatmul.mubr.f32.gmra.mxu0 %v485
      %v868 = vpop.f32.mrf.mxu0
      %v869 = vadd.f32 0.0, %v868
      %v870 = vpop.f32.mrf.mxu0
      %871 = vmatprep.mubr.f32.mxu0 0.0
      %872 = vmatmul.mubr.f32.gmra.mxu0 %v488
      %v873 = vpop.f32.mrf.mxu0
      %v874 = vadd.f32 0.0, %v873
      %v875 = vpop.f32.mrf.mxu0
      %876 = vmatprep.mubr.f32.mxu0 0.0
      %877 = vmatmul.mubr.f32.gmra.mxu0 %v491
      %v878 = vpop.f32.mrf.mxu0
      %v879 = vadd.f32 0.0, %v878
      %v880 = vpop.f32.mrf.mxu0
      %881 = vmatprep.mubr.f32.mxu0 0.0
      %882 = vmatmul.mubr.f32.gmra.mxu0 %v494
      %v883 = vpop.f32.mrf.mxu0
      %v884 = vadd.f32 0.0, %v883
      %v885 = vpop.f32.mrf.mxu0
      %886 = vmatprep.mubr.f32.mxu0 0.0
      %887 = vmatmul.mubr.f32.gmra.mxu0 %v497
      %v888 = vpop.f32.mrf.mxu0
      %v889 = vadd.f32 0.0, %v888
      %v890 = vpop.f32.mrf.mxu0
      %891 = vmatprep.mubr.f32.mxu0 0.0
      %892 = vmatmul.mubr.f32.gmra.mxu0 %v500
      %v893 = vpop.f32.mrf.mxu0
      %v894 = vadd.f32 0.0, %v893
      %v895 = vpop.f32.mrf.mxu0
      %896 = vmatprep.mubr.f32.mxu0 0.0
      %897 = vmatmul.mubr.f32.gmra.mxu0 %v503
      %v898 = vpop.f32.mrf.mxu0
      %v899 = vadd.f32 0.0, %v898
      %v900 = vpop.f32.mrf.mxu0
      %901 = vmatprep.mubr.f32.mxu0 0.0
      %902 = vmatmul.mubr.f32.gmra.mxu0 %v506
      %v903 = vpop.f32.mrf.mxu0
      %v904 = vadd.f32 0.0, %v903
      %v905 = vpop.f32.mrf.mxu0
      %906 = vdwg.mxu0
      %v907 = vsub.f32 0.0, %v579
      %v908 = vsub.f32 0.0, %v584
      %v909 = vsub.f32 0.0, %v589
      %v910 = vsub.f32 0.0, %v594
      %v911 = vsub.f32 0.0, %v599
      %v912 = vsub.f32 0.0, %v604
      %v913 = vsub.f32 0.0, %v609
      %v914 = vsub.f32 0.0, %v614
      %v915 = vsub.f32 0.0, %v619
      %v916 = vsub.f32 0.0, %v624
      %v917 = vsub.f32 0.0, %v629
      %v918 = vsub.f32 0.0, %v634
      %v919 = vsub.f32 0.0, %v639
      %v920 = vsub.f32 0.0, %v644
      %v921 = vsub.f32 0.0, %v649
      %v922 = vsub.f32 0.0, %v654
      %v923 = vsub.f32 0.0, %v659
      %v924 = vsub.f32 0.0, %v664
      %v925 = vsub.f32 0.0, %v669
      %v926 = vsub.f32 0.0, %v674
      %v927 = vsub.f32 0.0, %v679
      %v928 = vsub.f32 0.0, %v684
      %v929 = vsub.f32 0.0, %v689
      %v930 = vsub.f32 0.0, %v694
      %v931 = vsub.f32 0.0, %v699
      %v932 = vsub.f32 0.0, %v704
      %v933 = vsub.f32 0.0, %v709
      %v934 = vsub.f32 0.0, %v714
      %v935 = vsub.f32 0.0, %v719
      %v936 = vsub.f32 0.0, %v724
      %v937 = vsub.f32 0.0, %v729
      %v938 = vsub.f32 0.0, %v734
      %v939 = vsub.f32 0.0, %v739
      %v940 = vsub.f32 0.0, %v744
      %v941 = vsub.f32 0.0, %v749
      %v942 = vsub.f32 0.0, %v754
      %v943 = vsub.f32 0.0, %v759
      %v944 = vsub.f32 0.0, %v764
      %v945 = vsub.f32 0.0, %v769
      %v946 = vsub.f32 0.0, %v774
      %v947 = vsub.f32 0.0, %v779
      %v948 = vsub.f32 0.0, %v784
      %v949 = vsub.f32 0.0, %v789
      %v950 = vsub.f32 0.0, %v794
      %v951 = vsub.f32 0.0, %v799
      %v952 = vsub.f32 0.0, %v804
      %v953 = vsub.f32 0.0, %v809
      %v954 = vsub.f32 0.0, %v814
      %v955 = vsub.f32 0.0, %v819
      %v956 = vsub.f32 0.0, %v824
      %v957 = vsub.f32 0.0, %v829
      %v958 = vsub.f32 0.0, %v834
      %v959 = vsub.f32 0.0, %v839
      %v960 = vsub.f32 0.0, %v844
      %v961 = vsub.f32 0.0, %v849
      %v962 = vsub.f32 0.0, %v854
      %v963 = vsub.f32 0.0, %v859
      %v964 = vsub.f32 0.0, %v864
      %v965 = vsub.f32 0.0, %v869
      %v966 = vsub.f32 0.0, %v874
      %v967 = vsub.f32 0.0, %v879
      %v968 = vsub.f32 0.0, %v884
      %v969 = vsub.f32 0.0, %v889
      %v970 = vsub.f32 0.0, %v894
      %v971 = vsub.f32 0.0, %v899
      %v972 = vsub.f32 0.0, %v904
      %v973 = vmul.f32 %v907, 1.442695
      %v974 = vpow.pop %v973
      %v975 = vmul.f32 %v908, 1.442695
      %v976 = vpow.pop %v975
      %v977 = vmul.f32 %v909, 1.442695
      %v978 = vpow.pop %v977
      %v979 = vmul.f32 %v910, 1.442695
      %v980 = vpow.pop %v979
      %v981 = vmul.f32 %v911, 1.442695
      %v982 = vpow.pop %v981
      %v983 = vmul.f32 %v912, 1.442695
      %v984 = vpow.pop %v983
      %v985 = vmul.f32 %v913, 1.442695
      %v986 = vpow.pop %v985
      %v987 = vmul.f32 %v914, 1.442695
      %v988 = vpow.pop %v987
      %v989 = vmul.f32 %v915, 1.442695
      %v990 = vpow.pop %v989
      %v991 = vmul.f32 %v916, 1.442695
      %v992 = vpow.pop %v991
      %v993 = vmul.f32 %v917, 1.442695
      %v994 = vpow.pop %v993
      %v995 = vmul.f32 %v918, 1.442695
      %v996 = vpow.pop %v995
      %v997 = vmul.f32 %v919, 1.442695
      %v998 = vpow.pop %v997
      %v999 = vmul.f32 %v920, 1.442695
      %v1000 = vpow.pop %v999
      %v1001 = vmul.f32 %v921, 1.442695
      %v1002 = vpow.pop %v1001
      %v1003 = vmul.f32 %v922, 1.442695
      %v1004 = vpow.pop %v1003
      %v1005 = vmul.f32 %v923, 1.442695
      %v1006 = vpow.pop %v1005
      %v1007 = vmul.f32 %v924, 1.442695
      %v1008 = vpow.pop %v1007
      %v1009 = vmul.f32 %v925, 1.442695
      %v1010 = vpow.pop %v1009
      %v1011 = vmul.f32 %v926, 1.442695
      %v1012 = vpow.pop %v1011
      %v1013 = vmul.f32 %v927, 1.442695
      %v1014 = vpow.pop %v1013
      %v1015 = vmul.f32 %v928, 1.442695
      %v1016 = vpow.pop %v1015
      %v1017 = vmul.f32 %v929, 1.442695
      %v1018 = vpow.pop %v1017
      %v1019 = vmul.f32 %v930, 1.442695
      %v1020 = vpow.pop %v1019
      %v1021 = vmul.f32 %v931, 1.442695
      %v1022 = vpow.pop %v1021
      %v1023 = vmul.f32 %v932, 1.442695
      %v1024 = vpow.pop %v1023
      %v1025 = vmul.f32 %v933, 1.442695
      %v1026 = vpow.pop %v1025
      %v1027 = vmul.f32 %v934, 1.442695
      %v1028 = vpow.pop %v1027
      %v1029 = vmul.f32 %v935, 1.442695
      %v1030 = vpow.pop %v1029
      %v1031 = vmul.f32 %v936, 1.442695
      %v1032 = vpow.pop %v1031
      %v1033 = vmul.f32 %v937, 1.442695
      %v1034 = vpow.pop %v1033
      %v1035 = vmul.f32 %v938, 1.442695
      %v1036 = vpow.pop %v1035
      %v1037 = vmul.f32 %v939, 1.442695
      %v1038 = vpow.pop %v1037
      %v1039 = vmul.f32 %v940, 1.442695
      %v1040 = vpow.pop %v1039
      %v1041 = vmul.f32 %v941, 1.442695
      %v1042 = vpow.pop %v1041
      %v1043 = vmul.f32 %v942, 1.442695
      %v1044 = vpow.pop %v1043
      %v1045 = vmul.f32 %v943, 1.442695
      %v1046 = vpow.pop %v1045
      %v1047 = vmul.f32 %v944, 1.442695
      %v1048 = vpow.pop %v1047
      %v1049 = vmul.f32 %v945, 1.442695
      %v1050 = vpow.pop %v1049
      %v1051 = vmul.f32 %v946, 1.442695
      %v1052 = vpow.pop %v1051
      %v1053 = vmul.f32 %v947, 1.442695
      %v1054 = vpow.pop %v1053
      %v1055 = vmul.f32 %v948, 1.442695
      %v1056 = vpow.pop %v1055
      %v1057 = vmul.f32 %v949, 1.442695
      %v1058 = vpow.pop %v1057
      %v1059 = vmul.f32 %v950, 1.442695
      %v1060 = vpow.pop %v1059
      %v1061 = vmul.f32 %v951, 1.442695
      %v1062 = vpow.pop %v1061
      %v1063 = vmul.f32 %v952, 1.442695
      %v1064 = vpow.pop %v1063
      %v1065 = vmul.f32 %v953, 1.442695
      %v1066 = vpow.pop %v1065
      %v1067 = vmul.f32 %v954, 1.442695
      %v1068 = vpow.pop %v1067
      %v1069 = vmul.f32 %v955, 1.442695
      %v1070 = vpow.pop %v1069
      %v1071 = vmul.f32 %v956, 1.442695
      %v1072 = vpow.pop %v1071
      %v1073 = vmul.f32 %v957, 1.442695
      %v1074 = vpow.pop %v1073
      %v1075 = vmul.f32 %v958, 1.442695
      %v1076 = vpow.pop %v1075
      %v1077 = vmul.f32 %v959, 1.442695
      %v1078 = vpow.pop %v1077
      %v1079 = vmul.f32 %v960, 1.442695
      %v1080 = vpow.pop %v1079
      %v1081 = vmul.f32 %v961, 1.442695
      %v1082 = vpow.pop %v1081
      %v1083 = vmul.f32 %v962, 1.442695
      %v1084 = vpow.pop %v1083
      %v1085 = vmul.f32 %v963, 1.442695
      %v1086 = vpow.pop %v1085
      %v1087 = vmul.f32 %v964, 1.442695
      %v1088 = vpow.pop %v1087
      %v1089 = vmul.f32 %v965, 1.442695
      %v1090 = vpow.pop %v1089
      %v1091 = vmul.f32 %v966, 1.442695
      %v1092 = vpow.pop %v1091
      %v1093 = vmul.f32 %v967, 1.442695
      %v1094 = vpow.pop %v1093
      %v1095 = vmul.f32 %v968, 1.442695
      %v1096 = vpow.pop %v1095
      %v1097 = vmul.f32 %v969, 1.442695
      %v1098 = vpow.pop %v1097
      %v1099 = vmul.f32 %v970, 1.442695
      %v1100 = vpow.pop %v1099
      %v1101 = vmul.f32 %v971, 1.442695
      %v1102 = vpow.pop %v1101
      %v1103 = vmul.f32 %v972, 1.442695
      %v1104 = vpow.pop %v1103
      %v1105 = vadd.f32 %v974, 1.0
      %v1106 = vadd.f32 %v976, 1.0
      %v1107 = vadd.f32 %v978, 1.0
      %v1108 = vadd.f32 %v980, 1.0
      %v1109 = vadd.f32 %v982, 1.0
      %v1110 = vadd.f32 %v984, 1.0
      %v1111 = vadd.f32 %v986, 1.0
      %v1112 = vadd.f32 %v988, 1.0
      %v1113 = vadd.f32 %v990, 1.0
      %v1114 = vadd.f32 %v992, 1.0
      %v1115 = vadd.f32 %v994, 1.0
      %v1116 = vadd.f32 %v996, 1.0
      %v1117 = vadd.f32 %v998, 1.0
      %v1118 = vadd.f32 %v1000, 1.0
      %v1119 = vadd.f32 %v1002, 1.0
      %v1120 = vadd.f32 %v1004, 1.0
      %v1121 = vadd.f32 %v1006, 1.0
      %v1122 = vadd.f32 %v1008, 1.0
      %v1123 = vadd.f32 %v1010, 1.0
      %v1124 = vadd.f32 %v1012, 1.0
      %v1125 = vadd.f32 %v1014, 1.0
      %v1126 = vadd.f32 %v1016, 1.0
      %v1127 = vadd.f32 %v1018, 1.0
      %v1128 = vadd.f32 %v1020, 1.0
      %v1129 = vadd.f32 %v1022, 1.0
      %v1130 = vadd.f32 %v1024, 1.0
      %v1131 = vadd.f32 %v1026, 1.0
      %v1132 = vadd.f32 %v1028, 1.0
      %v1133 = vadd.f32 %v1030, 1.0
      %v1134 = vadd.f32 %v1032, 1.0
      %v1135 = vadd.f32 %v1034, 1.0
      %v1136 = vadd.f32 %v1036, 1.0
      %v1137 = vadd.f32 %v1038, 1.0
      %v1138 = vadd.f32 %v1040, 1.0
      %v1139 = vadd.f32 %v1042, 1.0
      %v1140 = vadd.f32 %v1044, 1.0
      %v1141 = vadd.f32 %v1046, 1.0
      %v1142 = vadd.f32 %v1048, 1.0
      %v1143 = vadd.f32 %v1050, 1.0
      %v1144 = vadd.f32 %v1052, 1.0
      %v1145 = vadd.f32 %v1054, 1.0
      %v1146 = vadd.f32 %v1056, 1.0
      %v1147 = vadd.f32 %v1058, 1.0
      %v1148 = vadd.f32 %v1060, 1.0
      %v1149 = vadd.f32 %v1062, 1.0
      %v1150 = vadd.f32 %v1064, 1.0
      %v1151 = vadd.f32 %v1066, 1.0
      %v1152 = vadd.f32 %v1068, 1.0
      %v1153 = vadd.f32 %v1070, 1.0
      %v1154 = vadd.f32 %v1072, 1.0
      %v1155 = vadd.f32 %v1074, 1.0
      %v1156 = vadd.f32 %v1076, 1.0
      %v1157 = vadd.f32 %v1078, 1.0
      %v1158 = vadd.f32 %v1080, 1.0
      %v1159 = vadd.f32 %v1082, 1.0
      %v1160 = vadd.f32 %v1084, 1.0
      %v1161 = vadd.f32 %v1086, 1.0
      %v1162 = vadd.f32 %v1088, 1.0
      %v1163 = vadd.f32 %v1090, 1.0
      %v1164 = vadd.f32 %v1092, 1.0
      %v1165 = vadd.f32 %v1094, 1.0
      %v1166 = vadd.f32 %v1096, 1.0
      %v1167 = vadd.f32 %v1098, 1.0
      %v1168 = vadd.f32 %v1100, 1.0
      %v1169 = vadd.f32 %v1102, 1.0
      %v1170 = vadd.f32 %v1104, 1.0
      %v1171 = vrcp.pop %v1105
      %v1172 = vrcp.pop %v1106
      %v1173 = vrcp.pop %v1107
      %v1174 = vrcp.pop %v1108
      %v1175 = vrcp.pop %v1109
      %v1176 = vrcp.pop %v1110
      %v1177 = vrcp.pop %v1111
      %v1178 = vrcp.pop %v1112
      %v1179 = vrcp.pop %v1113
      %v1180 = vrcp.pop %v1114
      %v1181 = vrcp.pop %v1115
      %v1182 = vrcp.pop %v1116
      %v1183 = vrcp.pop %v1117
      %v1184 = vrcp.pop %v1118
      %v1185 = vrcp.pop %v1119
      %v1186 = vrcp.pop %v1120
      %v1187 = vrcp.pop %v1121
      %v1188 = vrcp.pop %v1122
      %v1189 = vrcp.pop %v1123
      %v1190 = vrcp.pop %v1124
      %v1191 = vrcp.pop %v1125
      %v1192 = vrcp.pop %v1126
      %v1193 = vrcp.pop %v1127
      %v1194 = vrcp.pop %v1128
      %v1195 = vrcp.pop %v1129
      %v1196 = vrcp.pop %v1130
      %v1197 = vrcp.pop %v1131
      %v1198 = vrcp.pop %v1132
      %v1199 = vrcp.pop %v1133
      %v1200 = vrcp.pop %v1134
      %v1201 = vrcp.pop %v1135
      %v1202 = vrcp.pop %v1136
      %v1203 = vrcp.pop %v1137
      %v1204 = vrcp.pop %v1138
      %v1205 = vrcp.pop %v1139
      %v1206 = vrcp.pop %v1140
      %v1207 = vrcp.pop %v1141
      %v1208 = vrcp.pop %v1142
      %v1209 = vrcp.pop %v1143
      %v1210 = vrcp.pop %v1144
      %v1211 = vrcp.pop %v1145
      %v1212 = vrcp.pop %v1146
      %v1213 = vrcp.pop %v1147
      %v1214 = vrcp.pop %v1148
      %v1215 = vrcp.pop %v1149
      %v1216 = vrcp.pop %v1150
      %v1217 = vrcp.pop %v1151
      %v1218 = vrcp.pop %v1152
      %v1219 = vrcp.pop %v1153
      %v1220 = vrcp.pop %v1154
      %v1221 = vrcp.pop %v1155
      %v1222 = vrcp.pop %v1156
      %v1223 = vrcp.pop %v1157
      %v1224 = vrcp.pop %v1158
      %v1225 = vrcp.pop %v1159
      %v1226 = vrcp.pop %v1160
      %v1227 = vrcp.pop %v1161
      %v1228 = vrcp.pop %v1162
      %v1229 = vrcp.pop %v1163
      %v1230 = vrcp.pop %v1164
      %v1231 = vrcp.pop %v1165
      %v1232 = vrcp.pop %v1166
      %v1233 = vrcp.pop %v1167
      %v1234 = vrcp.pop %v1168
      %v1235 = vrcp.pop %v1169
      %v1236 = vrcp.pop %v1170
      %v1237 = vld [vmem:[%s222] sm:$0xff]
      %v1238 = vld [vmem:[%s222 + $0x8] sm:$0xff]
      %v1239 = vld [vmem:[%s222 + $0x10] sm:$0xff]
      %v1240 = vld [vmem:[%s222 + $0x18] sm:$0xff]
      %v1241 = vld [vmem:[%s222 + $0x20] sm:$0xff]
      %v1242 = vld [vmem:[%s222 + $0x28] sm:$0xff]
      %v1243 = vld [vmem:[%s222 + $0x30] sm:$0xff]
      %v1244 = vld [vmem:[%s222 + $0x38] sm:$0xff]
      %v1245 = vld [vmem:[%s222 + $0x40] sm:$0xff]
      %v1246 = vld [vmem:[%s222 + $0x48] sm:$0xff]
      %v1247 = vld [vmem:[%s222 + $0x50] sm:$0xff]
      %v1248 = vld [vmem:[%s222 + $0x58] sm:$0xff]
      %v1249 = vld [vmem:[%s222 + $0x60] sm:$0xff]
      %v1250 = vld [vmem:[%s222 + $0x68] sm:$0xff]
      %v1251 = vld [vmem:[%s222 + $0x70] sm:$0xff]
      %v1252 = vld [vmem:[%s222 + $0x78] sm:$0xff]
      %v1253 = vld [vmem:[%s222 + $0x80] sm:$0xff]
      %v1254 = vld [vmem:[%s222 + $0x88] sm:$0xff]
      %v1255 = vld [vmem:[%s222 + $0x90] sm:$0xff]
      %v1256 = vld [vmem:[%s222 + $0x98] sm:$0xff]
      %v1257 = vld [vmem:[%s222 + $0xa0] sm:$0xff]
      %v1258 = vld [vmem:[%s222 + $0xa8] sm:$0xff]
      %v1259 = vld [vmem:[%s222 + $0xb0] sm:$0xff]
      %v1260 = vld [vmem:[%s222 + $0xb8] sm:$0xff]
      %v1261 = vld [vmem:[%s222 + $0xc0] sm:$0xff]
      %v1262 = vld [vmem:[%s222 + $0xc8] sm:$0xff]
      %v1263 = vld [vmem:[%s222 + $0xd0] sm:$0xff]
      %v1264 = vld [vmem:[%s222 + $0xd8] sm:$0xff]
      %v1265 = vld [vmem:[%s222 + $0xe0] sm:$0xff]
      %v1266 = vld [vmem:[%s222 + $0xe8] sm:$0xff]
      %v1267 = vld [vmem:[%s222 + $0xf0] sm:$0xff]
      %v1268 = vld [vmem:[%s222 + $0xf8] sm:$0xff]
      %v1269 = vld [vmem:[%s222 + $0x100] sm:$0xff]
      %v1270 = vld [vmem:[%s222 + $0x108] sm:$0xff]
      %v1271 = vld [vmem:[%s222 + $0x110] sm:$0xff]
      %v1272 = vld [vmem:[%s222 + $0x118] sm:$0xff]
      %v1273 = vld [vmem:[%s222 + $0x120] sm:$0xff]
      %v1274 = vld [vmem:[%s222 + $0x128] sm:$0xff]
      %v1275 = vld [vmem:[%s222 + $0x130] sm:$0xff]
      %v1276 = vld [vmem:[%s222 + $0x138] sm:$0xff]
      %v1277 = vld [vmem:[%s222 + $0x140] sm:$0xff]
      %v1278 = vld [vmem:[%s222 + $0x148] sm:$0xff]
      %v1279 = vld [vmem:[%s222 + $0x150] sm:$0xff]
      %v1280 = vld [vmem:[%s222 + $0x158] sm:$0xff]
      %v1281 = vld [vmem:[%s222 + $0x160] sm:$0xff]
      %v1282 = vld [vmem:[%s222 + $0x168] sm:$0xff]
      %v1283 = vld [vmem:[%s222 + $0x170] sm:$0xff]
      %v1284 = vld [vmem:[%s222 + $0x178] sm:$0xff]
      %v1285 = vld [vmem:[%s222 + $0x180] sm:$0xff]
      %v1286 = vld [vmem:[%s222 + $0x188] sm:$0xff]
      %v1287 = vld [vmem:[%s222 + $0x190] sm:$0xff]
      %v1288 = vld [vmem:[%s222 + $0x198] sm:$0xff]
      %v1289 = vld [vmem:[%s222 + $0x1a0] sm:$0xff]
      %v1290 = vld [vmem:[%s222 + $0x1a8] sm:$0xff]
      %v1291 = vld [vmem:[%s222 + $0x1b0] sm:$0xff]
      %v1292 = vld [vmem:[%s222 + $0x1b8] sm:$0xff]
      %v1293 = vld [vmem:[%s222 + $0x1c0] sm:$0xff]
      %v1294 = vld [vmem:[%s222 + $0x1c8] sm:$0xff]
      %v1295 = vld [vmem:[%s222 + $0x1d0] sm:$0xff]
      %v1296 = vld [vmem:[%s222 + $0x1d8] sm:$0xff]
      %v1297 = vld [vmem:[%s222 + $0x1e0] sm:$0xff]
      %v1298 = vld [vmem:[%s222 + $0x1e8] sm:$0xff]
      %v1299 = vld [vmem:[%s222 + $0x1f0] sm:$0xff]
      %v1300 = vld [vmem:[%s222 + $0x1f8] sm:$0xff]
      %v1301 = vld [vmem:[%s222 + $0x200] sm:$0xff]
      %v1302 = vld [vmem:[%s222 + $0x208] sm:$0xff]
      %v1303 = vld [vmem:[%s222 + $0x210] sm:$0xff]
      %v1304 = vld [vmem:[%s222 + $0x218] sm:$0xff]
      %v1305 = vld [vmem:[%s222 + $0x220] sm:$0xff]
      %v1306 = vld [vmem:[%s222 + $0x228] sm:$0xff]
      %v1307 = vld [vmem:[%s222 + $0x230] sm:$0xff]
      %v1308 = vld [vmem:[%s222 + $0x238] sm:$0xff]
      %v1309 = vld [vmem:[%s222 + $0x240] sm:$0xff]
      %v1310 = vld [vmem:[%s222 + $0x248] sm:$0xff]
      %v1311 = vld [vmem:[%s222 + $0x250] sm:$0xff]
      %v1312 = vld [vmem:[%s222 + $0x258] sm:$0xff]
      %v1313 = vld [vmem:[%s222 + $0x260] sm:$0xff]
      %v1314 = vld [vmem:[%s222 + $0x268] sm:$0xff]
      %v1315 = vld [vmem:[%s222 + $0x270] sm:$0xff]
      %v1316 = vld [vmem:[%s222 + $0x278] sm:$0xff]
      %v1317 = vld [vmem:[%s222 + $0x280] sm:$0xff]
      %v1318 = vld [vmem:[%s222 + $0x288] sm:$0xff]
      %v1319 = vld [vmem:[%s222 + $0x290] sm:$0xff]
      %v1320 = vld [vmem:[%s222 + $0x298] sm:$0xff]
      %v1321 = vld [vmem:[%s222 + $0x2a0] sm:$0xff]
      %v1322 = vld [vmem:[%s222 + $0x2a8] sm:$0xff]
      %v1323 = vld [vmem:[%s222 + $0x2b0] sm:$0xff]
      %v1324 = vld [vmem:[%s222 + $0x2b8] sm:$0xff]
      %v1325 = vld [vmem:[%s222 + $0x2c0] sm:$0xff]
      %v1326 = vld [vmem:[%s222 + $0x2c8] sm:$0xff]
      %v1327 = vld [vmem:[%s222 + $0x2d0] sm:$0xff]
      %v1328 = vld [vmem:[%s222 + $0x2d8] sm:$0xff]
      %v1329 = vld [vmem:[%s222 + $0x2e0] sm:$0xff]
      %v1330 = vld [vmem:[%s222 + $0x2e8] sm:$0xff]
      %v1331 = vld [vmem:[%s222 + $0x2f0] sm:$0xff]
      %v1332 = vld [vmem:[%s222 + $0x2f8] sm:$0xff]
      %v1333 = vld [vmem:[%s222 + $0x300] sm:$0xff]
      %v1334 = vld [vmem:[%s222 + $0x308] sm:$0xff]
      %v1335 = vld [vmem:[%s222 + $0x310] sm:$0xff]
      %v1336 = vld [vmem:[%s222 + $0x318] sm:$0xff]
      %v1337 = vld [vmem:[%s222 + $0x320] sm:$0xff]
      %v1338 = vld [vmem:[%s222 + $0x328] sm:$0xff]
      %v1339 = vld [vmem:[%s222 + $0x330] sm:$0xff]
      %v1340 = vld [vmem:[%s222 + $0x338] sm:$0xff]
      %v1341 = vld [vmem:[%s222 + $0x340] sm:$0xff]
      %v1342 = vld [vmem:[%s222 + $0x348] sm:$0xff]
      %v1343 = vld [vmem:[%s222 + $0x350] sm:$0xff]
      %v1344 = vld [vmem:[%s222 + $0x358] sm:$0xff]
      %v1345 = vld [vmem:[%s222 + $0x360] sm:$0xff]
      %v1346 = vld [vmem:[%s222 + $0x368] sm:$0xff]
      %v1347 = vld [vmem:[%s222 + $0x370] sm:$0xff]
      %v1348 = vld [vmem:[%s222 + $0x378] sm:$0xff]
      %v1349 = vld [vmem:[%s222 + $0x380] sm:$0xff]
      %v1350 = vld [vmem:[%s222 + $0x388] sm:$0xff]
      %v1351 = vld [vmem:[%s222 + $0x390] sm:$0xff]
      %v1352 = vld [vmem:[%s222 + $0x398] sm:$0xff]
      %v1353 = vld [vmem:[%s222 + $0x3a0] sm:$0xff]
      %v1354 = vld [vmem:[%s222 + $0x3a8] sm:$0xff]
      %v1355 = vld [vmem:[%s222 + $0x3b0] sm:$0xff]
      %v1356 = vld [vmem:[%s222 + $0x3b8] sm:$0xff]
      %v1357 = vld [vmem:[%s222 + $0x3c0] sm:$0xff]
      %v1358 = vld [vmem:[%s222 + $0x3c8] sm:$0xff]
      %v1359 = vld [vmem:[%s222 + $0x3d0] sm:$0xff]
      %v1360 = vld [vmem:[%s222 + $0x3d8] sm:$0xff]
      %v1361 = vld [vmem:[%s222 + $0x3e0] sm:$0xff]
      %v1362 = vld [vmem:[%s222 + $0x3e8] sm:$0xff]
      %v1363 = vld [vmem:[%s222 + $0x3f0] sm:$0xff]
      %v1364 = vld [vmem:[%s222 + $0x3f8] sm:$0xff]
      %v1365 = vld [vmem:[%s222 + $0x400] sm:$0xff]
      %v1366 = vld [vmem:[%s222 + $0x408] sm:$0xff]
      %v1367 = vld [vmem:[%s222 + $0x410] sm:$0xff]
      %v1368 = vld [vmem:[%s222 + $0x418] sm:$0xff]
      %1370 = vset.pattern.permute.xlu0 0
      %1371 = vperm.xlu0 %1370, %v1171
      %v1372 = vpop.permute.xlu0 %1371
      %1375 = vset.pattern.permute.xlu0 0
      %1376 = vperm.xlu0 %1375, %v1172
      %v1377 = vpop.permute.xlu0 %1376
      %1380 = vset.pattern.permute.xlu0 0
      %1381 = vperm.xlu0 %1380, %v1173
      %v1382 = vpop.permute.xlu0 %1381
      %1385 = vset.pattern.permute.xlu0 0
      %1386 = vperm.xlu0 %1385, %v1174
      %v1387 = vpop.permute.xlu0 %1386
      %1390 = vset.pattern.permute.xlu0 0
      %1391 = vperm.xlu0 %1390, %v1175
      %v1392 = vpop.permute.xlu0 %1391
      %1395 = vset.pattern.permute.xlu0 0
      %1396 = vperm.xlu0 %1395, %v1176
      %v1397 = vpop.permute.xlu0 %1396
      %1400 = vset.pattern.permute.xlu0 0
      %1401 = vperm.xlu0 %1400, %v1177
      %v1402 = vpop.permute.xlu0 %1401
      %1405 = vset.pattern.permute.xlu0 0
      %1406 = vperm.xlu0 %1405, %v1178
      %v1407 = vpop.permute.xlu0 %1406
      %1410 = vset.pattern.permute.xlu0 0
      %1411 = vperm.xlu0 %1410, %v1179
      %v1412 = vpop.permute.xlu0 %1411
      %1415 = vset.pattern.permute.xlu0 0
      %1416 = vperm.xlu0 %1415, %v1180
      %v1417 = vpop.permute.xlu0 %1416
      %1420 = vset.pattern.permute.xlu0 0
      %1421 = vperm.xlu0 %1420, %v1181
      %v1422 = vpop.permute.xlu0 %1421
      %1425 = vset.pattern.permute.xlu0 0
      %1426 = vperm.xlu0 %1425, %v1182
      %v1427 = vpop.permute.xlu0 %1426
      %1430 = vset.pattern.permute.xlu0 0
      %1431 = vperm.xlu0 %1430, %v1183
      %v1432 = vpop.permute.xlu0 %1431
      %1435 = vset.pattern.permute.xlu0 0
      %1436 = vperm.xlu0 %1435, %v1184
      %v1437 = vpop.permute.xlu0 %1436
      %1440 = vset.pattern.permute.xlu0 0
      %1441 = vperm.xlu0 %1440, %v1185
      %v1442 = vpop.permute.xlu0 %1441
      %1445 = vset.pattern.permute.xlu0 0
      %1446 = vperm.xlu0 %1445, %v1186
      %v1447 = vpop.permute.xlu0 %1446
      %1450 = vset.pattern.permute.xlu0 0
      %1451 = vperm.xlu0 %1450, %v1187
      %v1452 = vpop.permute.xlu0 %1451
      %1455 = vset.pattern.permute.xlu0 0
      %1456 = vperm.xlu0 %1455, %v1188
      %v1457 = vpop.permute.xlu0 %1456
      %1460 = vset.pattern.permute.xlu0 0
      %1461 = vperm.xlu0 %1460, %v1189
      %v1462 = vpop.permute.xlu0 %1461
      %1465 = vset.pattern.permute.xlu0 0
      %1466 = vperm.xlu0 %1465, %v1190
      %v1467 = vpop.permute.xlu0 %1466
      %1470 = vset.pattern.permute.xlu0 0
      %1471 = vperm.xlu0 %1470, %v1191
      %v1472 = vpop.permute.xlu0 %1471
      %1475 = vset.pattern.permute.xlu0 0
      %1476 = vperm.xlu0 %1475, %v1192
      %v1477 = vpop.permute.xlu0 %1476
      %1480 = vset.pattern.permute.xlu0 0
      %1481 = vperm.xlu0 %1480, %v1193
      %v1482 = vpop.permute.xlu0 %1481
      %1485 = vset.pattern.permute.xlu0 0
      %1486 = vperm.xlu0 %1485, %v1194
      %v1487 = vpop.permute.xlu0 %1486
      %1490 = vset.pattern.permute.xlu0 0
      %1491 = vperm.xlu0 %1490, %v1195
      %v1492 = vpop.permute.xlu0 %1491
      %1495 = vset.pattern.permute.xlu0 0
      %1496 = vperm.xlu0 %1495, %v1196
      %v1497 = vpop.permute.xlu0 %1496
      %1500 = vset.pattern.permute.xlu0 0
      %1501 = vperm.xlu0 %1500, %v1197
      %v1502 = vpop.permute.xlu0 %1501
      %1505 = vset.pattern.permute.xlu0 0
      %1506 = vperm.xlu0 %1505, %v1198
      %v1507 = vpop.permute.xlu0 %1506
      %1510 = vset.pattern.permute.xlu0 0
      %1511 = vperm.xlu0 %1510, %v1199
      %v1512 = vpop.permute.xlu0 %1511
      %1515 = vset.pattern.permute.xlu0 0
      %1516 = vperm.xlu0 %1515, %v1200
      %v1517 = vpop.permute.xlu0 %1516
      %1520 = vset.pattern.permute.xlu0 0
      %1521 = vperm.xlu0 %1520, %v1201
      %v1522 = vpop.permute.xlu0 %1521
      %1525 = vset.pattern.permute.xlu0 0
      %1526 = vperm.xlu0 %1525, %v1202
      %v1527 = vpop.permute.xlu0 %1526
      %1530 = vset.pattern.permute.xlu0 0
      %1531 = vperm.xlu0 %1530, %v1203
      %v1532 = vpop.permute.xlu0 %1531
      %1535 = vset.pattern.permute.xlu0 0
      %1536 = vperm.xlu0 %1535, %v1204
      %v1537 = vpop.permute.xlu0 %1536
      %1540 = vset.pattern.permute.xlu0 0
      %1541 = vperm.xlu0 %1540, %v1205
      %v1542 = vpop.permute.xlu0 %1541
      %1545 = vset.pattern.permute.xlu0 0
      %1546 = vperm.xlu0 %1545, %v1206
      %v1547 = vpop.permute.xlu0 %1546
      %1550 = vset.pattern.permute.xlu0 0
      %1551 = vperm.xlu0 %1550, %v1207
      %v1552 = vpop.permute.xlu0 %1551
      %1555 = vset.pattern.permute.xlu0 0
      %1556 = vperm.xlu0 %1555, %v1208
      %v1557 = vpop.permute.xlu0 %1556
      %1560 = vset.pattern.permute.xlu0 0
      %1561 = vperm.xlu0 %1560, %v1209
      %v1562 = vpop.permute.xlu0 %1561
      %1565 = vset.pattern.permute.xlu0 0
      %1566 = vperm.xlu0 %1565, %v1210
      %v1567 = vpop.permute.xlu0 %1566
      %1570 = vset.pattern.permute.xlu0 0
      %1571 = vperm.xlu0 %1570, %v1211
      %v1572 = vpop.permute.xlu0 %1571
      %1575 = vset.pattern.permute.xlu0 0
      %1576 = vperm.xlu0 %1575, %v1212
      %v1577 = vpop.permute.xlu0 %1576
      %1580 = vset.pattern.permute.xlu0 0
      %1581 = vperm.xlu0 %1580, %v1213
      %v1582 = vpop.permute.xlu0 %1581
      %1585 = vset.pattern.permute.xlu0 0
      %1586 = vperm.xlu0 %1585, %v1214
      %v1587 = vpop.permute.xlu0 %1586
      %1590 = vset.pattern.permute.xlu0 0
      %1591 = vperm.xlu0 %1590, %v1215
      %v1592 = vpop.permute.xlu0 %1591
      %1595 = vset.pattern.permute.xlu0 0
      %1596 = vperm.xlu0 %1595, %v1216
      %v1597 = vpop.permute.xlu0 %1596
      %1600 = vset.pattern.permute.xlu0 0
      %1601 = vperm.xlu0 %1600, %v1217
      %v1602 = vpop.permute.xlu0 %1601
      %1605 = vset.pattern.permute.xlu0 0
      %1606 = vperm.xlu0 %1605, %v1218
      %v1607 = vpop.permute.xlu0 %1606
      %1610 = vset.pattern.permute.xlu0 0
      %1611 = vperm.xlu0 %1610, %v1219
      %v1612 = vpop.permute.xlu0 %1611
      %1615 = vset.pattern.permute.xlu0 0
      %1616 = vperm.xlu0 %1615, %v1220
      %v1617 = vpop.permute.xlu0 %1616
      %1620 = vset.pattern.permute.xlu0 0
      %1621 = vperm.xlu0 %1620, %v1221
      %v1622 = vpop.permute.xlu0 %1621
      %1625 = vset.pattern.permute.xlu0 0
      %1626 = vperm.xlu0 %1625, %v1222
      %v1627 = vpop.permute.xlu0 %1626
      %1630 = vset.pattern.permute.xlu0 0
      %1631 = vperm.xlu0 %1630, %v1223
      %v1632 = vpop.permute.xlu0 %1631
      %1635 = vset.pattern.permute.xlu0 0
      %1636 = vperm.xlu0 %1635, %v1224
      %v1637 = vpop.permute.xlu0 %1636
      %1640 = vset.pattern.permute.xlu0 0
      %1641 = vperm.xlu0 %1640, %v1225
      %v1642 = vpop.permute.xlu0 %1641
      %1645 = vset.pattern.permute.xlu0 0
      %1646 = vperm.xlu0 %1645, %v1226
      %v1647 = vpop.permute.xlu0 %1646
      %1650 = vset.pattern.permute.xlu0 0
      %1651 = vperm.xlu0 %1650, %v1227
      %v1652 = vpop.permute.xlu0 %1651
      %1655 = vset.pattern.permute.xlu0 0
      %1656 = vperm.xlu0 %1655, %v1228
      %v1657 = vpop.permute.xlu0 %1656
      %1660 = vset.pattern.permute.xlu0 0
      %1661 = vperm.xlu0 %1660, %v1229
      %v1662 = vpop.permute.xlu0 %1661
      %1665 = vset.pattern.permute.xlu0 0
      %1666 = vperm.xlu0 %1665, %v1230
      %v1667 = vpop.permute.xlu0 %1666
      %1670 = vset.pattern.permute.xlu0 0
      %1671 = vperm.xlu0 %1670, %v1231
      %v1672 = vpop.permute.xlu0 %1671
      %1675 = vset.pattern.permute.xlu0 0
      %1676 = vperm.xlu0 %1675, %v1232
      %v1677 = vpop.permute.xlu0 %1676
      %1680 = vset.pattern.permute.xlu0 0
      %1681 = vperm.xlu0 %1680, %v1233
      %v1682 = vpop.permute.xlu0 %1681
      %1685 = vset.pattern.permute.xlu0 0
      %1686 = vperm.xlu0 %1685, %v1234
      %v1687 = vpop.permute.xlu0 %1686
      %1690 = vset.pattern.permute.xlu0 0
      %1691 = vperm.xlu0 %1690, %v1235
      %v1692 = vpop.permute.xlu0 %1691
      %1695 = vset.pattern.permute.xlu0 0
      %1696 = vperm.xlu0 %1695, %v1236
      %v1697 = vpop.permute.xlu0 %1696
      %v1699 = vmul.f32 %v1237, %v1372
      %v1700 = vmul.f32 %v1238, %v1372
      %v1701 = vmul.f32 %v1239, %v1377
      %v1702 = vmul.f32 %v1240, %v1377
      %v1703 = vmul.f32 %v1241, %v1382
      %v1704 = vmul.f32 %v1242, %v1382
      %v1705 = vmul.f32 %v1243, %v1387
      %v1706 = vmul.f32 %v1244, %v1387
      %v1707 = vmul.f32 %v1245, %v1392
      %v1708 = vmul.f32 %v1246, %v1392
      %v1709 = vmul.f32 %v1247, %v1397
      %v1710 = vmul.f32 %v1248, %v1397
      %v1711 = vmul.f32 %v1249, %v1402
      %v1712 = vmul.f32 %v1250, %v1402
      %v1713 = vmul.f32 %v1251, %v1407
      %v1714 = vmul.f32 %v1252, %v1407
      %v1715 = vmul.f32 %v1253, %v1412
      %v1716 = vmul.f32 %v1254, %v1412
      %v1717 = vmul.f32 %v1255, %v1417
      %v1718 = vmul.f32 %v1256, %v1417
      %v1719 = vmul.f32 %v1257, %v1422
      %v1720 = vmul.f32 %v1258, %v1422
      %v1721 = vmul.f32 %v1259, %v1427
      %v1722 = vmul.f32 %v1260, %v1427
      %v1723 = vmul.f32 %v1261, %v1432
      %v1724 = vmul.f32 %v1262, %v1432
      %v1725 = vmul.f32 %v1263, %v1437
      %v1726 = vmul.f32 %v1264, %v1437
      %v1727 = vmul.f32 %v1265, %v1442
      %v1728 = vmul.f32 %v1266, %v1442
      %v1729 = vmul.f32 %v1267, %v1447
      %v1730 = vmul.f32 %v1268, %v1447
      %v1731 = vmul.f32 %v1269, %v1452
      %v1732 = vmul.f32 %v1270, %v1452
      %v1733 = vmul.f32 %v1271, %v1457
      %v1734 = vmul.f32 %v1272, %v1457
      %v1735 = vmul.f32 %v1273, %v1462
      %v1736 = vmul.f32 %v1274, %v1462
      %v1737 = vmul.f32 %v1275, %v1467
      %v1738 = vmul.f32 %v1276, %v1467
      %v1739 = vmul.f32 %v1277, %v1472
      %v1740 = vmul.f32 %v1278, %v1472
      %v1741 = vmul.f32 %v1279, %v1477
      %v1742 = vmul.f32 %v1280, %v1477
      %v1743 = vmul.f32 %v1281, %v1482
      %v1744 = vmul.f32 %v1282, %v1482
      %v1745 = vmul.f32 %v1283, %v1487
      %v1746 = vmul.f32 %v1284, %v1487
      %v1747 = vmul.f32 %v1285, %v1492
      %v1748 = vmul.f32 %v1286, %v1492
      %v1749 = vmul.f32 %v1287, %v1497
      %v1750 = vmul.f32 %v1288, %v1497
      %v1751 = vmul.f32 %v1289, %v1502
      %v1752 = vmul.f32 %v1290, %v1502
      %v1753 = vmul.f32 %v1291, %v1507
      %v1754 = vmul.f32 %v1292, %v1507
      %v1755 = vmul.f32 %v1293, %v1512
      %v1756 = vmul.f32 %v1294, %v1512
      %v1757 = vmul.f32 %v1295, %v1517
      %v1758 = vmul.f32 %v1296, %v1517
      %v1759 = vmul.f32 %v1297, %v1522
      %v1760 = vmul.f32 %v1298, %v1522
      %v1761 = vmul.f32 %v1299, %v1527
      %v1762 = vmul.f32 %v1300, %v1527
      %v1763 = vmul.f32 %v1301, %v1532
      %v1764 = vmul.f32 %v1302, %v1532
      %v1765 = vmul.f32 %v1303, %v1537
      %v1766 = vmul.f32 %v1304, %v1537
      %v1767 = vmul.f32 %v1305, %v1542
      %v1768 = vmul.f32 %v1306, %v1542
      %v1769 = vmul.f32 %v1307, %v1547
      %v1770 = vmul.f32 %v1308, %v1547
      %v1771 = vmul.f32 %v1309, %v1552
      %v1772 = vmul.f32 %v1310, %v1552
      %v1773 = vmul.f32 %v1311, %v1557
      %v1774 = vmul.f32 %v1312, %v1557
      %v1775 = vmul.f32 %v1313, %v1562
      %v1776 = vmul.f32 %v1314, %v1562
      %v1777 = vmul.f32 %v1315, %v1567
      %v1778 = vmul.f32 %v1316, %v1567
      %v1779 = vmul.f32 %v1317, %v1572
      %v1780 = vmul.f32 %v1318, %v1572
      %v1781 = vmul.f32 %v1319, %v1577
      %v1782 = vmul.f32 %v1320, %v1577
      %v1783 = vmul.f32 %v1321, %v1582
      %v1784 = vmul.f32 %v1322, %v1582
      %v1785 = vmul.f32 %v1323, %v1587
      %v1786 = vmul.f32 %v1324, %v1587
      %v1787 = vmul.f32 %v1325, %v1592
      %v1788 = vmul.f32 %v1326, %v1592
      %v1789 = vmul.f32 %v1327, %v1597
      %v1790 = vmul.f32 %v1328, %v1597
      %v1791 = vmul.f32 %v1329, %v1602
      %v1792 = vmul.f32 %v1330, %v1602
      %v1793 = vmul.f32 %v1331, %v1607
      %v1794 = vmul.f32 %v1332, %v1607
      %v1795 = vmul.f32 %v1333, %v1612
      %v1796 = vmul.f32 %v1334, %v1612
      %v1797 = vmul.f32 %v1335, %v1617
      %v1798 = vmul.f32 %v1336, %v1617
      %v1799 = vmul.f32 %v1337, %v1622
      %v1800 = vmul.f32 %v1338, %v1622
      %v1801 = vmul.f32 %v1339, %v1627
      %v1802 = vmul.f32 %v1340, %v1627
      %v1803 = vmul.f32 %v1341, %v1632
      %v1804 = vmul.f32 %v1342, %v1632
      %v1805 = vmul.f32 %v1343, %v1637
      %v1806 = vmul.f32 %v1344, %v1637
      %v1807 = vmul.f32 %v1345, %v1642
      %v1808 = vmul.f32 %v1346, %v1642
      %v1809 = vmul.f32 %v1347, %v1647
      %v1810 = vmul.f32 %v1348, %v1647
      %v1811 = vmul.f32 %v1349, %v1652
      %v1812 = vmul.f32 %v1350, %v1652
      %v1813 = vmul.f32 %v1351, %v1657
      %v1814 = vmul.f32 %v1352, %v1657
      %v1815 = vmul.f32 %v1353, %v1662
      %v1816 = vmul.f32 %v1354, %v1662
      %v1817 = vmul.f32 %v1355, %v1667
      %v1818 = vmul.f32 %v1356, %v1667
      %v1819 = vmul.f32 %v1357, %v1672
      %v1820 = vmul.f32 %v1358, %v1672
      %v1821 = vmul.f32 %v1359, %v1677
      %v1822 = vmul.f32 %v1360, %v1677
      %v1823 = vmul.f32 %v1361, %v1682
      %v1824 = vmul.f32 %v1362, %v1682
      %v1825 = vmul.f32 %v1363, %v1687
      %v1826 = vmul.f32 %v1364, %v1687
      %v1827 = vmul.f32 %v1365, %v1692
      %v1828 = vmul.f32 %v1366, %v1692
      %v1829 = vmul.f32 %v1367, %v1697
      %v1830 = vmul.f32 %v1368, %v1697
      %1831 = vst [vmem:[%s233] sm:$0xff] %v1699
      %vm1832 = vcmask 556032
      %1833 = vst.msk [vmem:[%s233 + $0x8] sm:$0xff] %vm1832, %v1700
      %1834 = vst [vmem:[%s233 + $0x10] sm:$0xff] %v1701
      %1835 = vst.msk [vmem:[%s233 + $0x18] sm:$0xff] %vm1832, %v1702
      %1836 = vst [vmem:[%s233 + $0x20] sm:$0xff] %v1703
      %1837 = vst.msk [vmem:[%s233 + $0x28] sm:$0xff] %vm1832, %v1704
      %1838 = vst [vmem:[%s233 + $0x30] sm:$0xff] %v1705
      %1839 = vst.msk [vmem:[%s233 + $0x38] sm:$0xff] %vm1832, %v1706
      %1840 = vst [vmem:[%s233 + $0x40] sm:$0xff] %v1707
      %1841 = vst.msk [vmem:[%s233 + $0x48] sm:$0xff] %vm1832, %v1708
      %1842 = vst [vmem:[%s233 + $0x50] sm:$0xff] %v1709
      %1843 = vst.msk [vmem:[%s233 + $0x58] sm:$0xff] %vm1832, %v1710
      %1844 = vst [vmem:[%s233 + $0x60] sm:$0xff] %v1711
      %1845 = vst.msk [vmem:[%s233 + $0x68] sm:$0xff] %vm1832, %v1712
      %1846 = vst [vmem:[%s233 + $0x70] sm:$0xff] %v1713
      %1847 = vst.msk [vmem:[%s233 + $0x78] sm:$0xff] %vm1832, %v1714
      %1848 = vst [vmem:[%s233 + $0x80] sm:$0xff] %v1715
      %1849 = vst.msk [vmem:[%s233 + $0x88] sm:$0xff] %vm1832, %v1716
      %1850 = vst [vmem:[%s233 + $0x90] sm:$0xff] %v1717
      %1851 = vst.msk [vmem:[%s233 + $0x98] sm:$0xff] %vm1832, %v1718
      %1852 = vst [vmem:[%s233 + $0xa0] sm:$0xff] %v1719
      %1853 = vst.msk [vmem:[%s233 + $0xa8] sm:$0xff] %vm1832, %v1720
      %1854 = vst [vmem:[%s233 + $0xb0] sm:$0xff] %v1721
      %1855 = vst.msk [vmem:[%s233 + $0xb8] sm:$0xff] %vm1832, %v1722
      %1856 = vst [vmem:[%s233 + $0xc0] sm:$0xff] %v1723
      %1857 = vst.msk [vmem:[%s233 + $0xc8] sm:$0xff] %vm1832, %v1724
      %1858 = vst [vmem:[%s233 + $0xd0] sm:$0xff] %v1725
      %1859 = vst.msk [vmem:[%s233 + $0xd8] sm:$0xff] %vm1832, %v1726
      %1860 = vst [vmem:[%s233 + $0xe0] sm:$0xff] %v1727
      %1861 = vst.msk [vmem:[%s233 + $0xe8] sm:$0xff] %vm1832, %v1728
      %1862 = vst [vmem:[%s233 + $0xf0] sm:$0xff] %v1729
      %1863 = vst.msk [vmem:[%s233 + $0xf8] sm:$0xff] %vm1832, %v1730
      %1864 = vst [vmem:[%s233 + $0x100] sm:$0xff] %v1731
      %1865 = vst.msk [vmem:[%s233 + $0x108] sm:$0xff] %vm1832, %v1732
      %1866 = vst [vmem:[%s233 + $0x110] sm:$0xff] %v1733
      %1867 = vst.msk [vmem:[%s233 + $0x118] sm:$0xff] %vm1832, %v1734
      %1868 = vst [vmem:[%s233 + $0x120] sm:$0xff] %v1735
      %1869 = vst.msk [vmem:[%s233 + $0x128] sm:$0xff] %vm1832, %v1736
      %1870 = vst [vmem:[%s233 + $0x130] sm:$0xff] %v1737
      %1871 = vst.msk [vmem:[%s233 + $0x138] sm:$0xff] %vm1832, %v1738
      %1872 = vst [vmem:[%s233 + $0x140] sm:$0xff] %v1739
      %1873 = vst.msk [vmem:[%s233 + $0x148] sm:$0xff] %vm1832, %v1740
      %1874 = vst [vmem:[%s233 + $0x150] sm:$0xff] %v1741
      %1875 = vst.msk [vmem:[%s233 + $0x158] sm:$0xff] %vm1832, %v1742
      %1876 = vst [vmem:[%s233 + $0x160] sm:$0xff] %v1743
      %1877 = vst.msk [vmem:[%s233 + $0x168] sm:$0xff] %vm1832, %v1744
      %1878 = vst [vmem:[%s233 + $0x170] sm:$0xff] %v1745
      %1879 = vst.msk [vmem:[%s233 + $0x178] sm:$0xff] %vm1832, %v1746
      %1880 = vst [vmem:[%s233 + $0x180] sm:$0xff] %v1747
      %1881 = vst.msk [vmem:[%s233 + $0x188] sm:$0xff] %vm1832, %v1748
      %1882 = vst [vmem:[%s233 + $0x190] sm:$0xff] %v1749
      %1883 = vst.msk [vmem:[%s233 + $0x198] sm:$0xff] %vm1832, %v1750
      %1884 = vst [vmem:[%s233 + $0x1a0] sm:$0xff] %v1751
      %1885 = vst.msk [vmem:[%s233 + $0x1a8] sm:$0xff] %vm1832, %v1752
      %1886 = vst [vmem:[%s233 + $0x1b0] sm:$0xff] %v1753
      %1887 = vst.msk [vmem:[%s233 + $0x1b8] sm:$0xff] %vm1832, %v1754
      %1888 = vst [vmem:[%s233 + $0x1c0] sm:$0xff] %v1755
      %1889 = vst.msk [vmem:[%s233 + $0x1c8] sm:$0xff] %vm1832, %v1756
      %1890 = vst [vmem:[%s233 + $0x1d0] sm:$0xff] %v1757
      %1891 = vst.msk [vmem:[%s233 + $0x1d8] sm:$0xff] %vm1832, %v1758
      %1892 = vst [vmem:[%s233 + $0x1e0] sm:$0xff] %v1759
      %1893 = vst.msk [vmem:[%s233 + $0x1e8] sm:$0xff] %vm1832, %v1760
      %1894 = vst [vmem:[%s233 + $0x1f0] sm:$0xff] %v1761
      %1895 = vst.msk [vmem:[%s233 + $0x1f8] sm:$0xff] %vm1832, %v1762
      %1896 = vst [vmem:[%s233 + $0x200] sm:$0xff] %v1763
      %1897 = vst.msk [vmem:[%s233 + $0x208] sm:$0xff] %vm1832, %v1764
      %1898 = vst [vmem:[%s233 + $0x210] sm:$0xff] %v1765
      %1899 = vst.msk [vmem:[%s233 + $0x218] sm:$0xff] %vm1832, %v1766
      %1900 = vst [vmem:[%s233 + $0x220] sm:$0xff] %v1767
      %1901 = vst.msk [vmem:[%s233 + $0x228] sm:$0xff] %vm1832, %v1768
      %1902 = vst [vmem:[%s233 + $0x230] sm:$0xff] %v1769
      %1903 = vst.msk [vmem:[%s233 + $0x238] sm:$0xff] %vm1832, %v1770
      %1904 = vst [vmem:[%s233 + $0x240] sm:$0xff] %v1771
      %1905 = vst.msk [vmem:[%s233 + $0x248] sm:$0xff] %vm1832, %v1772
      %1906 = vst [vmem:[%s233 + $0x250] sm:$0xff] %v1773
      %1907 = vst.msk [vmem:[%s233 + $0x258] sm:$0xff] %vm1832, %v1774
      %1908 = vst [vmem:[%s233 + $0x260] sm:$0xff] %v1775
      %1909 = vst.msk [vmem:[%s233 + $0x268] sm:$0xff] %vm1832, %v1776
      %1910 = vst [vmem:[%s233 + $0x270] sm:$0xff] %v1777
      %1911 = vst.msk [vmem:[%s233 + $0x278] sm:$0xff] %vm1832, %v1778
      %1912 = vst [vmem:[%s233 + $0x280] sm:$0xff] %v1779
      %1913 = vst.msk [vmem:[%s233 + $0x288] sm:$0xff] %vm1832, %v1780
      %1914 = vst [vmem:[%s233 + $0x290] sm:$0xff] %v1781
      %1915 = vst.msk [vmem:[%s233 + $0x298] sm:$0xff] %vm1832, %v1782
      %1916 = vst [vmem:[%s233 + $0x2a0] sm:$0xff] %v1783
      %1917 = vst.msk [vmem:[%s233 + $0x2a8] sm:$0xff] %vm1832, %v1784
      %1918 = vst [vmem:[%s233 + $0x2b0] sm:$0xff] %v1785
      %1919 = vst.msk [vmem:[%s233 + $0x2b8] sm:$0xff] %vm1832, %v1786
      %1920 = vst [vmem:[%s233 + $0x2c0] sm:$0xff] %v1787
      %1921 = vst.msk [vmem:[%s233 + $0x2c8] sm:$0xff] %vm1832, %v1788
      %1922 = vst [vmem:[%s233 + $0x2d0] sm:$0xff] %v1789
      %1923 = vst.msk [vmem:[%s233 + $0x2d8] sm:$0xff] %vm1832, %v1790
      %1924 = vst [vmem:[%s233 + $0x2e0] sm:$0xff] %v1791
      %1925 = vst.msk [vmem:[%s233 + $0x2e8] sm:$0xff] %vm1832, %v1792
      %1926 = vst [vmem:[%s233 + $0x2f0] sm:$0xff] %v1793
      %1927 = vst.msk [vmem:[%s233 + $0x2f8] sm:$0xff] %vm1832, %v1794
      %1928 = vst [vmem:[%s233 + $0x300] sm:$0xff] %v1795
      %1929 = vst.msk [vmem:[%s233 + $0x308] sm:$0xff] %vm1832, %v1796
      %1930 = vst [vmem:[%s233 + $0x310] sm:$0xff] %v1797
      %1931 = vst.msk [vmem:[%s233 + $0x318] sm:$0xff] %vm1832, %v1798
      %1932 = vst [vmem:[%s233 + $0x320] sm:$0xff] %v1799
      %1933 = vst.msk [vmem:[%s233 + $0x328] sm:$0xff] %vm1832, %v1800
      %1934 = vst [vmem:[%s233 + $0x330] sm:$0xff] %v1801
      %1935 = vst.msk [vmem:[%s233 + $0x338] sm:$0xff] %vm1832, %v1802
      %1936 = vst [vmem:[%s233 + $0x340] sm:$0xff] %v1803
      %1937 = vst.msk [vmem:[%s233 + $0x348] sm:$0xff] %vm1832, %v1804
      %1938 = vst [vmem:[%s233 + $0x350] sm:$0xff] %v1805
      %1939 = vst.msk [vmem:[%s233 + $0x358] sm:$0xff] %vm1832, %v1806
      %1940 = vst [vmem:[%s233 + $0x360] sm:$0xff] %v1807
      %1941 = vst.msk [vmem:[%s233 + $0x368] sm:$0xff] %vm1832, %v1808
      %1942 = vst [vmem:[%s233 + $0x370] sm:$0xff] %v1809
      %1943 = vst.msk [vmem:[%s233 + $0x378] sm:$0xff] %vm1832, %v1810
      %1944 = vst [vmem:[%s233 + $0x380] sm:$0xff] %v1811
      %1945 = vst.msk [vmem:[%s233 + $0x388] sm:$0xff] %vm1832, %v1812
      %1946 = vst [vmem:[%s233 + $0x390] sm:$0xff] %v1813
      %1947 = vst.msk [vmem:[%s233 + $0x398] sm:$0xff] %vm1832, %v1814
      %1948 = vst [vmem:[%s233 + $0x3a0] sm:$0xff] %v1815
      %1949 = vst.msk [vmem:[%s233 + $0x3a8] sm:$0xff] %vm1832, %v1816
      %1950 = vst [vmem:[%s233 + $0x3b0] sm:$0xff] %v1817
      %1951 = vst.msk [vmem:[%s233 + $0x3b8] sm:$0xff] %vm1832, %v1818
      %1952 = vst [vmem:[%s233 + $0x3c0] sm:$0xff] %v1819
      %1953 = vst.msk [vmem:[%s233 + $0x3c8] sm:$0xff] %vm1832, %v1820
      %1954 = vst [vmem:[%s233 + $0x3d0] sm:$0xff] %v1821
      %1955 = vst.msk [vmem:[%s233 + $0x3d8] sm:$0xff] %vm1832, %v1822
      %1956 = vst [vmem:[%s233 + $0x3e0] sm:$0xff] %v1823
      %1957 = vst.msk [vmem:[%s233 + $0x3e8] sm:$0xff] %vm1832, %v1824
      %1958 = vst [vmem:[%s233 + $0x3f0] sm:$0xff] %v1825
      %1959 = vst.msk [vmem:[%s233 + $0x3f8] sm:$0xff] %vm1832, %v1826
      %1960 = vst [vmem:[%s233 + $0x400] sm:$0xff] %v1827
      %1961 = vst.msk [vmem:[%s233 + $0x408] sm:$0xff] %vm1832, %v1828
      %1962 = vst [vmem:[%s233 + $0x410] sm:$0xff] %v1829
      %1963 = vst.msk [vmem:[%s233 + $0x418] sm:$0xff] %vm1832, %v1830
      %s1964 = smul.u32 66, %s19
      %p1965 = scmp.lt.s32.totalorder %s18, 0
      %s1966 = scalar_select %p1965, %s18, 0
      %p1967 = scmp.lt.s32.totalorder %s1964, 131
      %s1968 = scalar_select %p1967, %s1964, 131
      %s1969 = smul.addr %s1968, 2
      %s1970 = smul.addr %s1966, 264
      %s1971 = sadd.s32 %s1969, %s1970
      %s1972 = smul.addr %s1971, 8
      %s1973 = scalar_lea.vmem %s3, %s1972
      // Predicated region
      $region33: #{tpu_custom_call.1} parent=31 // pred_check
        %p1974 = pneg %p121
      $region34: #{tpu_custom_call.1} parent=31 // pred_check_branch
        %1976 = sbr.rel (%p1974) target = $region36
      $region35: #{tpu_custom_call.1} parent=31 // pred_region
        %s1977 = smul.u32 66, %s19
      $region36: #{tpu_custom_call.1} parent=31 // pred_fallthru
        _
    $region32: #{tpu_custom_call.1} parent=5 // pred_fallthru
      _
    %p1978 = scmp.le.s32.totalorder 2, %s9
    // Predicated region
    $region37: #{tpu_custom_call.1} parent=5 // pred_check
      %p1979 = pneg %p1978
    $region38: #{tpu_custom_call.1} parent=5 // pred_check_branch
      %1981 = sbr.rel (%p1979) target = $region40
    $region39: #{tpu_custom_call.1} parent=5 // pred_region
      %s1982 = ssub.s32 %s9, 2
      // Predicated region
      $region41: #{tpu_custom_call.1} parent=39 // pred_check
        %p1983 = pneg %p127
      $region42: #{tpu_custom_call.1} parent=39 // pred_check_branch
        %1985 = sbr.rel (%p1983) target = $region44
      $region43: #{tpu_custom_call.1} parent=39 // pred_region
        %s1986 = smul.u32 66, %s21
        %p1987 = scmp.lt.s32.totalorder %s20, 0
        %s1988 = scalar_select %p1987, %s20, 0
        %p1989 = scmp.lt.s32.totalorder %s1986, 131
        %s1990 = scalar_select %p1989, %s1986, 131
        %s1991 = smul.addr %s1990, 2
        %s1992 = smul.addr %s1988, 264
        %s1993 = sadd.s32 %s1991, %s1992
        %s1994 = smul.addr %s1993, 8
        %s1995 = scalar_lea.vmem %s3, %s1994
      $region44: #{tpu_custom_call.1} parent=39 // pred_fallthru
        _
    $region40: #{tpu_custom_call.1} parent=5 // pred_fallthru
      _
  $region6: #{tpu_custom_call.1} parent=0 // loop_footer
    %s13 = sadd.s32 1, %s9
  $region7: #{tpu_custom_call.1} parent=0 // loop_footer_branch
    %8 = sbr.rel target = $region3
  $region8: #{tpu_custom_call.1} parent=0 // loop_exit
    _

</llo_original>
